<compile_context>
chip_gen: v6e
topology: v6e:2x2x1
jax: 0.10.0
libtpu: 0.0.40
codegen_flags: <defaults>
</compile_context>

<pallas_src>
import functools

import jax
import jax.numpy as jnp
from jax.experimental import pallas as pl
from jax.experimental.pallas import tpu as pltpu

LOG_SIG_MIN = -20.0
LOG_SIG_MAX = 2.0
PACK = 128            # lane-dense packed output width (multiple of 128 -> unmasked stores)
TASK_TILE_TARGET = 8  # max tasks folded per grid step (blocks stay well under a few MiB)


def _choose_task_tile(t, target=TASK_TILE_TARGET):
    """Largest divisor of t that is <= target while (if possible) leaving >= 2 grid
    steps, so v7x's two TensorCores get a parallel axis to shard."""
    best = 1
    for d in range(1, min(t, target) + 1):
        if t % d != 0:
            continue
        if t // d >= 2 or t == 1:
            best = d
    return best


def _mm(x, w_ref):
    # bf16 MXU inputs, f32 accumulation.
    return jnp.dot(x.astype(jnp.bfloat16), w_ref[...],
                   preferred_element_type=jnp.float32)


# ---------------------------------------------------------------------------
# Fused kernel: encoder MLP + product-of-Gaussians + rsample(z)
#               + policy MLP + TanhGaussian head          (grid over task tiles)
# ---------------------------------------------------------------------------
def _pearl_fused_kernel(ctx_ref, obs_ref, eps_z_ref, eps_a_ref,
                        we1_ref, be1_ref, we2_ref, be2_ref, we3_ref, be3_ref,
                        wp1o_ref, wp1z_ref, bp1_ref, wp2_ref, bp2_ref,
                        whead_ref, bhead_ref,
                        enc_ref, pol_ref,
                        *, latent_dim, action_dim):
    T, n, C = ctx_ref.shape
    _, b, od = obs_ref.shape
    L, A = latent_dim, action_dim

    # ---- context encoder: all T*n context rows in one matmul chain ---------
    c = ctx_ref[...].reshape(T * n, C)
    h = jnp.maximum(_mm(c, we1_ref) + be1_ref[...], 0.0)            # (T*n, H)
    h = jnp.maximum(_mm(h, we2_ref) + be2_ref[...], 0.0)            # (T*n, H)
    params = _mm(h, we3_ref) + be3_ref[...]                         # (T*n, 2L)

    # ---- product-of-Gaussians posterior per task + rsample(z) --------------
    mu = params[:, :L].reshape(T, n, L)
    sigma_sq = jnp.maximum(jax.nn.softplus(params[:, L:]), 1e-7).reshape(T, n, L)
    inv = 1.0 / sigma_sq                       # exact (feeds returned z_means/z_vars/z)
    sum_inv = jnp.sum(inv, axis=1)             # (T, L)
    var = 1.0 / sum_inv                        # exact: var == std * std
    mean = var * jnp.sum(mu * inv, axis=1)     # (T, L)
    std = jnp.sqrt(var)
    z = mean + std * eps_z_ref[...].reshape(T, L)                   # rsample()

    enc_pad = jnp.zeros((T, PACK - 3 * L), jnp.float32)
    enc_ref[...] = jnp.concatenate([mean, var, z, enc_pad],
                                   axis=1).reshape(T, 1, PACK)

    # ---- policy MLP (concat([obs, task_z]) folded via the Wp1 split) -------
    o = obs_ref[...].reshape(T * b, od)
    h_obs = _mm(o, wp1o_ref)                                        # (T*b, H)
    z_h = _mm(z, wp1z_ref)                                          # (T,   H)
    H = h_obs.shape[1]
    h1 = h_obs.reshape(T, b, H) + z_h.reshape(T, 1, H) + bp1_ref[...]
    h1 = jnp.maximum(h1, 0.0).reshape(T * b, H)
    h2 = jnp.maximum(_mm(h1, wp2_ref) + bp2_ref[...], 0.0)          # (T*b, H)
    ms = _mm(h2, whead_ref) + bhead_ref[...]                        # (T*b, 2A) = [mean|log_std]

    # Clip only the log_std lanes in place: the first 2A output lanes then come
    # straight from the head matmul (no extra concat pieces for mean/log_std).
    lane = jax.lax.broadcasted_iota(jnp.int32, ms.shape, 1)
    head = jnp.where(lane >= A, jnp.clip(ms, LOG_SIG_MIN, LOG_SIG_MAX), ms)
    mean_a = head[:, :A]
    log_std = head[:, A:]
    std_a = jnp.exp(log_std)
    eps = eps_a_ref[...].reshape(T * b, A)
    pre_tanh = mean_a + std_a * eps                                 # rsample()
    action = jnp.tanh(pre_tanh)
    # Normal(mean, std).log_prob(pre_tanh) with pre_tanh = mean + std*eps
    normal_lp = -0.5 * jnp.square(eps) - log_std - 0.5 * jnp.log(2.0 * jnp.pi)
    lp = normal_lp - jnp.log(1.0 - action * action + 1e-6)          # rlkit TanhNormal correction
    log_prob = jnp.sum(lp, axis=1, keepdims=True)                   # (T*b, 1)

    pol_pad = jnp.zeros((T * b, PACK - (4 * A + 1)), jnp.float32)
    pol_ref[...] = jnp.concatenate([head, action, pre_tanh, log_prob, pol_pad],
                                   axis=1).reshape(T, b, PACK)


def pearl_fused(obs, context, eps_z, eps_a, params, *, latent_dim, action_dim,
                task_tile=None):
    (We1, be1, We2, be2, We3, be3,
     Wp1o, Wp1z, bp1, Wp2, bp2, Whead, bhead) = params
    t, b, od = obs.shape
    _, n, C = context.shape
    L, A = latent_dim, action_dim
    assert 3 * L <= PACK and 4 * A + 1 <= PACK

    if task_tile is None:
        task_tile = _choose_task_tile(t)
    assert t % task_tile == 0
    grid = (t // task_tile,)

    def task_spec(shape):
        nd = len(shape)
        return pl.BlockSpec((task_tile,) + tuple(shape[1:]),
                            lambda i: (i,) + (0,) * (nd - 1))

    def const_spec(arr):
        nd = arr.ndim
        return pl.BlockSpec(arr.shape, lambda i: (0,) * nd)

    kernel = functools.partial(_pearl_fused_kernel,
                               latent_dim=L, action_dim=A)

    enc, pol = pl.pallas_call(
        kernel,
        out_shape=(jax.ShapeDtypeStruct((t, 1, PACK), jnp.float32),
                   jax.ShapeDtypeStruct((t, b, PACK), jnp.float32)),
        grid=grid,
        in_specs=[
            task_spec(context.shape), task_spec(obs.shape),
            task_spec(eps_z.shape), task_spec(eps_a.shape),
            const_spec(We1), const_spec(be1), const_spec(We2), const_spec(be2),
            const_spec(We3), const_spec(be3),
            const_spec(Wp1o), const_spec(Wp1z), const_spec(bp1),
            const_spec(Wp2), const_spec(bp2), const_spec(Whead), const_spec(bhead),
        ],
        out_specs=(pl.BlockSpec((task_tile, 1, PACK), lambda i: (i, 0, 0)),
                   pl.BlockSpec((task_tile, b, PACK), lambda i: (i, 0, 0))),
        compiler_params=pltpu.CompilerParams(
            dimension_semantics=("parallel",),
            # Blocks here are << 1 MiB; 48 MiB stays under v7x's 64 MiB physical
            # VMEM with headroom while still allowing much larger task tiles on
            # v5e/v6e (128 MiB physical) at realistic PEARL sizes.
            vmem_limit_bytes=48 * 1024 * 1024),
    )(context, obs, eps_z, eps_a, We1, be1, We2, be2, We3, be3,
      Wp1o, Wp1z, bp1, Wp2, bp2, Whead, bhead)
    return enc, pol


# ---------------------------------------------------------------------------
# Jitted wrapper: eps generation -> fused kernel -> lane-slice unpacking
# ---------------------------------------------------------------------------
def _pearl_forward(params, obs, context, key, *, latent_dim, action_dim):
    t, b, _ = obs.shape
    L, A = latent_dim, action_dim

    k_z, k_a = jax.random.split(key)
    eps_z = jax.random.normal(k_z, (t, 1, L), jnp.float32)
    eps_a = jax.random.normal(k_a, (t, b, A), jnp.float32)

    enc, pol = pearl_fused(obs, context, eps_z, eps_a, params,
                           latent_dim=L, action_dim=A)

    z_means = enc[:, 0, 0 * L:1 * L]
    z_vars = enc[:, 0, 1 * L:2 * L]
    z = enc[:, 0, 2 * L:3 * L]

    mean = pol[:, :, 0 * A:1 * A].reshape(t * b, A)
    log_std = pol[:, :, 1 * A:2 * A].reshape(t * b, A)
    action = pol[:, :, 2 * A:3 * A].reshape(t * b, A)
    pre_tanh = pol[:, :, 3 * A:4 * A].reshape(t * b, A)
    log_prob = pol[:, :, 4 * A:4 * A + 1].reshape(t * b, 1)

    task_z = jnp.repeat(z, b, axis=0)                              # (t*b, L)
    policy_outputs = (action, mean, log_std, log_prob, pre_tanh)
    return policy_outputs, task_z, z_means, z_vars, z


# ---------------------------------------------------------------------------
# PEARLAgent wrapper
# ---------------------------------------------------------------------------
class PEARLAgentPallas:
    def __init__(self, latent_dim, obs_dim, action_dim, hidden_dim, key):
        self.latent_dim = latent_dim
        self.obs_dim = obs_dim
        self.action_dim = action_dim
        self.hidden_dim = hidden_dim
        # use_next_state=False -> context row = [obs, act, reward]
        self.context_dim = obs_dim + action_dim + 1

        ks = jax.random.split(key, 9)

        def init_w(k, fan_in, fan_out):
            bound = 1.0 / jnp.sqrt(jnp.float32(fan_in))
            return jax.random.uniform(k, (fan_in, fan_out), jnp.float32, -bound, bound)

        H, L, A, C = hidden_dim, latent_dim, action_dim, self.context_dim
        wdt = jnp.bfloat16  # MXU input dtype; accumulation stays f32 in-kernel.
        # (use jnp.float32 here if bit-parity with torch fp32 matmuls is required)

        # context encoder: C -> H -> H -> 2L
        self.We1 = init_w(ks[0], C, H).astype(wdt)
        self.be1 = jnp.zeros((1, H), jnp.float32)
        self.We2 = init_w(ks[1], H, H).astype(wdt)
        self.be2 = jnp.zeros((1, H), jnp.float32)
        self.We3 = init_w(ks[2], H, 2 * L).astype(wdt)
        self.be3 = jnp.zeros((1, 2 * L), jnp.float32)

        # policy: (obs_dim + L) -> H -> H -> [mean | log_std]
        Wp1 = init_w(ks[3], obs_dim + L, H)
        self.Wp1_obs = Wp1[:obs_dim].astype(wdt)        # (obs_dim, H)
        self.Wp1_z = Wp1[obs_dim:].astype(wdt)          # (L, H)
        self.bp1 = jnp.zeros((1, H), jnp.float32)
        self.Wp2 = init_w(ks[4], H, H).astype(wdt)
        self.bp2 = jnp.zeros((1, H), jnp.float32)
        Wm = init_w(ks[5], H, A)
        Ws = init_w(ks[6], H, A)
        self.Whead = jnp.concatenate([Wm, Ws], axis=1).astype(wdt)  # (H, 2A)
        self.bhead = jnp.zeros((1, 2 * A), jnp.float32)

        # CURL bilinear weight W (compute_logits only; unused by forward)
        self.W_curl = jax.random.uniform(ks[7], (L, L), jnp.float32)

        self._params = (self.We1, self.be1, self.We2, self.be2, self.We3, self.be3,
                        self.Wp1_obs, self.Wp1_z, self.bp1, self.Wp2, self.bp2,
                        self.Whead, self.bhead)

        # One jitted executable: eps generation + fused kernel + output unpacking.
        self._forward_jit = jax.jit(functools.partial(
            _pearl_forward, latent_dim=latent_dim, action_dim=action_dim))

        self.clear_z(ks[8])

    def clear_z(self, key, num_tasks=1):
        """reset q(z|c) to the prior and sample z (use_ib=True path)."""
        self.z_means = jnp.zeros((num_tasks, self.latent_dim), jnp.float32)
        self.z_vars = jnp.ones((num_tasks, self.latent_dim), jnp.float32)
        self.z = self.z_means + jnp.sqrt(self.z_vars) * jax.random.normal(
            key, (num_tasks, self.latent_dim), jnp.float32)

    def forward(self, obs, context, key):
        policy_outputs, task_z, z_means, z_vars, z = self._forward_jit(
            self._params, obs, context, key)
        self.z_means, self.z_vars, self.z = z_means, z_vars, z
        return policy_outputs, task_z


# ---------------------------------------------------------------------------
# Pure-JAX reference (mirrors the kernel math / dtypes exactly) for validation
# ---------------------------------------------------------------------------
def _reference_forward(agent, obs, context, key):
    f32, bf16 = jnp.float32, jnp.bfloat16
    t, b, _ = obs.shape
    n = context.shape[1]
    L, A = agent.latent_dim, agent.action_dim

    def mm(x, w):
        return jnp.dot(x.astype(bf16), w.astype(bf16), preferred_element_type=f32)

    k_z, k_a = jax.random.split(key)
    eps_z = jax.random.normal(k_z, (t, 1, L), f32)
    eps_a = jax.random.normal(k_a, (t, b, A), f32)

    c = context.reshape(t * n, -1)
    h = jnp.maximum(mm(c, agent.We1) + agent.be1, 0.0)
    h = jnp.maximum(mm(h, agent.We2) + agent.be2, 0.0)
    params = mm(h, agent.We3) + agent.be3
    mu = params[:, :L].reshape(t, n, L)
    sigma_sq = jnp.maximum(jax.nn.softplus(params[:, L:]), 1e-7).reshape(t, n, L)
    inv = 1.0 / sigma_sq
    sum_inv = jnp.sum(inv, axis=1)
    z_vars = 1.0 / sum_inv
    z_means = z_vars * jnp.sum(mu * inv, axis=1)
    z = z_means + jnp.sqrt(z_vars) * eps_z[:, 0, :]

    o = obs.reshape(t * b, -1)
    H = agent.hidden_dim
    h1 = mm(o, agent.Wp1_obs).reshape(t, b, H) + mm(z, agent.Wp1_z).reshape(t, 1, H) + agent.bp1
    h1 = jnp.maximum(h1, 0.0).reshape(t * b, H)
    h2 = jnp.maximum(mm(h1, agent.Wp2) + agent.bp2, 0.0)
    ms = mm(h2, agent.Whead) + agent.bhead
    mean = ms[:, :A]
    log_std = jnp.clip(ms[:, A:], LOG_SIG_MIN, LOG_SIG_MAX)
    std = jnp.exp(log_std)
    eps = eps_a.reshape(t * b, A)
    pre_tanh = mean + std * eps
    action = jnp.tanh(pre_tanh)
    normal_lp = -0.5 * jnp.square(eps) - log_std - 0.5 * jnp.log(2.0 * jnp.pi)
    log_prob = jnp.sum(normal_lp - jnp.log(1.0 - action * action + 1e-6),
                       axis=1, keepdims=True)
    task_z = jnp.repeat(z, b, axis=0)
    return (action, mean, log_std, log_prob, pre_tanh), task_z, z_means, z_vars


if __name__ == "__main__":
    # small shapes: t (tasks)=4, b (obs per task)=8, n (context len)=8
    t, b, n = 4, 8, 8
    obs_dim, action_dim, latent_dim, hidden_dim = 16, 4, 8, 32

    key = jax.random.PRNGKey(0)
    k_param, k_obs, k_ctx, k_fwd = jax.random.split(key, 4)

    agent = PEARLAgentPallas(latent_dim, obs_dim, action_dim, hidden_dim, k_param)

    obs = jax.random.normal(k_obs, (t, b, obs_dim), jnp.float32)
    context = jax.random.normal(k_ctx, (t, n, obs_dim + action_dim + 1), jnp.float32)

    policy_outputs, task_z = agent.forward(obs, context, k_fwd)
    jax.block_until_ready(policy_outputs)
    jax.block_until_ready(task_z)

    action, mean, log_std, log_prob, pre_tanh = policy_outputs
    assert action.shape == (t * b, action_dim)
    assert mean.shape == (t * b, action_dim)
    assert log_std.shape == (t * b, action_dim)
    assert pre_tanh.shape == (t * b, action_dim)
    assert log_prob.shape == (t * b, 1)
    assert task_z.shape == (t * b, latent_dim)
    assert agent.z_means.shape == (t, latent_dim)
    assert agent.z_vars.shape == (t, latent_dim)
    assert bool(jnp.all(jnp.isfinite(action)))
    assert bool(jnp.all(jnp.isfinite(log_prob)))
    assert bool(jnp.all(agent.z_vars > 0.0))

    # Validate against the pure-JAX reference (same bf16-MXU / f32-accumulate math).
    (ref_action, ref_mean, ref_log_std, ref_log_prob, ref_pre_tanh), \
        ref_task_z, ref_z_means, ref_z_vars = _reference_forward(agent, obs, context, k_fwd)

    def close(a, r, tol=5e-3):
        return bool(jnp.allclose(a, r, rtol=tol, atol=tol))

    assert close(agent.z_means, ref_z_means)
    assert close(agent.z_vars, ref_z_vars)
    assert close(task_z, ref_task_z)
    assert close(mean, ref_mean)
    assert close(log_std, ref_log_std)
    assert close(action, ref_action)
    assert close(pre_tanh, ref_pre_tanh)
    assert close(log_prob, ref_log_prob, tol=3e-2)

    print("KERNEL_OK")
</pallas_src>

<mosaic_0001>
module attributes {stable_mosaic.version = 11 : i64} {
  func.func @_pearl_fused_kernel(%arg0: i32, %arg1: memref<2x8x21xf32, #tpu.memory_space<vmem>>, %arg2: memref<2x8x16xf32, #tpu.memory_space<vmem>>, %arg3: memref<2x1x8xf32, #tpu.memory_space<vmem>>, %arg4: memref<2x8x4xf32, #tpu.memory_space<vmem>>, %arg5: memref<21x32xbf16, #tpu.memory_space<vmem>>, %arg6: memref<1x32xf32, #tpu.memory_space<vmem>>, %arg7: memref<32x32xbf16, #tpu.memory_space<vmem>>, %arg8: memref<1x32xf32, #tpu.memory_space<vmem>>, %arg9: memref<32x16xbf16, #tpu.memory_space<vmem>>, %arg10: memref<1x16xf32, #tpu.memory_space<vmem>>, %arg11: memref<16x32xbf16, #tpu.memory_space<vmem>>, %arg12: memref<8x32xbf16, #tpu.memory_space<vmem>>, %arg13: memref<1x32xf32, #tpu.memory_space<vmem>>, %arg14: memref<32x32xbf16, #tpu.memory_space<vmem>>, %arg15: memref<1x32xf32, #tpu.memory_space<vmem>>, %arg16: memref<32x8xbf16, #tpu.memory_space<vmem>>, %arg17: memref<1x8xf32, #tpu.memory_space<vmem>>, %arg18: memref<2x1x128xf32, #tpu.memory_space<vmem>>, %arg19: memref<2x8x128xf32, #tpu.memory_space<vmem>>) attributes {dimension_semantics = [#tpu.dimension_semantics<parallel>], iteration_bounds = array<i64: 2>, scalar_prefetch = 0 : i64, scratch_operands = 0 : i64, tpu.core_type = #tpu.core_type<tc>, window_params = [{transform_indices = @transform_0, window_bounds = array<i64: 2, 8, 21>}, {transform_indices = @transform_1, window_bounds = array<i64: 2, 8, 16>}, {transform_indices = @transform_2, window_bounds = array<i64: 2, 1, 8>}, {transform_indices = @transform_3, window_bounds = array<i64: 2, 8, 4>}, {pipeline_mode = #tpu.pipeline_mode<synchronous>, transform_indices = @transform_4, window_bounds = array<i64: 21, 32>}, {pipeline_mode = #tpu.pipeline_mode<synchronous>, transform_indices = @transform_5, window_bounds = array<i64: 1, 32>}, {pipeline_mode = #tpu.pipeline_mode<synchronous>, transform_indices = @transform_6, window_bounds = array<i64: 32, 32>}, {pipeline_mode = #tpu.pipeline_mode<synchronous>, transform_indices = @transform_7, window_bounds = array<i64: 1, 32>}, {pipeline_mode = #tpu.pipeline_mode<synchronous>, transform_indices = @transform_8, window_bounds = array<i64: 32, 16>}, {pipeline_mode = #tpu.pipeline_mode<synchronous>, transform_indices = @transform_9, window_bounds = array<i64: 1, 16>}, {pipeline_mode = #tpu.pipeline_mode<synchronous>, transform_indices = @transform_10, window_bounds = array<i64: 16, 32>}, {pipeline_mode = #tpu.pipeline_mode<synchronous>, transform_indices = @transform_11, window_bounds = array<i64: 8, 32>}, {pipeline_mode = #tpu.pipeline_mode<synchronous>, transform_indices = @transform_12, window_bounds = array<i64: 1, 32>}, {pipeline_mode = #tpu.pipeline_mode<synchronous>, transform_indices = @transform_13, window_bounds = array<i64: 32, 32>}, {pipeline_mode = #tpu.pipeline_mode<synchronous>, transform_indices = @transform_14, window_bounds = array<i64: 1, 32>}, {pipeline_mode = #tpu.pipeline_mode<synchronous>, transform_indices = @transform_15, window_bounds = array<i64: 32, 8>}, {pipeline_mode = #tpu.pipeline_mode<synchronous>, transform_indices = @transform_16, window_bounds = array<i64: 1, 8>}, {transform_indices = @transform_17, window_bounds = array<i64: 2, 1, 128>}, {transform_indices = @transform_18, window_bounds = array<i64: 2, 8, 128>}]} {
    %c0 = arith.constant 0 : index
    %c0_0 = arith.constant 0 : index
    %c0_1 = arith.constant 0 : index
    %0 = vector.load %arg1[%c0, %c0_0, %c0_1] : memref<2x8x21xf32, #tpu.memory_space<vmem>>, vector<2x8x21xf32>
    %1 = vector.shape_cast %0 : vector<2x8x21xf32> to vector<16x21xf32>
    %2 = arith.truncf %1 : vector<16x21xf32> to vector<16x21xbf16>
    %c0_2 = arith.constant 0 : index
    %c0_3 = arith.constant 0 : index
    %3 = vector.load %arg5[%c0_2, %c0_3] : memref<21x32xbf16, #tpu.memory_space<vmem>>, vector<21x32xbf16>
    %cst = arith.constant dense<0.000000e+00> : vector<16x32xf32>
    %4 = tpu.matmul %2, %3, %cst {dimension_numbers = #tpu.dot_dimension_numbers<[1], [0], [0], [1], [0, 0, 1, 1], [], []>} : vector<16x21xbf16>, vector<21x32xbf16>, vector<16x32xf32> -> vector<16x32xf32>
    %c0_4 = arith.constant 0 : index
    %c0_5 = arith.constant 0 : index
    %5 = vector.load %arg6[%c0_4, %c0_5] : memref<1x32xf32, #tpu.memory_space<vmem>>, vector<1x32xf32>
    %6 = vector.broadcast %5 : vector<1x32xf32> to vector<16x32xf32>
    %7 = arith.addf %4, %6 : vector<16x32xf32>
    %cst_6 = arith.constant 0.000000e+00 : f32
    %8 = vector.broadcast %cst_6 : f32 to vector<16x32xf32>
    %9 = arith.maximumf %7, %8 : vector<16x32xf32>
    %10 = arith.truncf %9 : vector<16x32xf32> to vector<16x32xbf16>
    %c0_7 = arith.constant 0 : index
    %c0_8 = arith.constant 0 : index
    %11 = vector.load %arg7[%c0_7, %c0_8] : memref<32x32xbf16, #tpu.memory_space<vmem>>, vector<32x32xbf16>
    %cst_9 = arith.constant dense<0.000000e+00> : vector<16x32xf32>
    %12 = tpu.matmul %10, %11, %cst_9 {dimension_numbers = #tpu.dot_dimension_numbers<[1], [0], [0], [1], [0, 0, 1, 1], [], []>} : vector<16x32xbf16>, vector<32x32xbf16>, vector<16x32xf32> -> vector<16x32xf32>
    %c0_10 = arith.constant 0 : index
    %c0_11 = arith.constant 0 : index
    %13 = vector.load %arg8[%c0_10, %c0_11] : memref<1x32xf32, #tpu.memory_space<vmem>>, vector<1x32xf32>
    %14 = vector.broadcast %13 : vector<1x32xf32> to vector<16x32xf32>
    %15 = arith.addf %12, %14 : vector<16x32xf32>
    %cst_12 = arith.constant 0.000000e+00 : f32
    %16 = vector.broadcast %cst_12 : f32 to vector<16x32xf32>
    %17 = arith.maximumf %15, %16 : vector<16x32xf32>
    %18 = arith.truncf %17 : vector<16x32xf32> to vector<16x32xbf16>
    %c0_13 = arith.constant 0 : index
    %c0_14 = arith.constant 0 : index
    %19 = vector.load %arg9[%c0_13, %c0_14] : memref<32x16xbf16, #tpu.memory_space<vmem>>, vector<32x16xbf16>
    %cst_15 = arith.constant dense<0.000000e+00> : vector<16x16xf32>
    %20 = tpu.matmul %18, %19, %cst_15 {dimension_numbers = #tpu.dot_dimension_numbers<[1], [0], [0], [1], [0, 0, 1, 1], [], []>} : vector<16x32xbf16>, vector<32x16xbf16>, vector<16x16xf32> -> vector<16x16xf32>
    %c0_16 = arith.constant 0 : index
    %c0_17 = arith.constant 0 : index
    %21 = vector.load %arg10[%c0_16, %c0_17] : memref<1x16xf32, #tpu.memory_space<vmem>>, vector<1x16xf32>
    %22 = vector.broadcast %21 : vector<1x16xf32> to vector<16x16xf32>
    %23 = arith.addf %20, %22 : vector<16x16xf32>
    %24 = vector.extract_strided_slice %23 {offsets = [0, 0], sizes = [16, 8], strides = [1, 1]} : vector<16x16xf32> to vector<16x8xf32>
    %25 = vector.shape_cast %24 : vector<16x8xf32> to vector<2x8x8xf32>
    %26 = vector.extract_strided_slice %23 {offsets = [0, 8], sizes = [16, 8], strides = [1, 1]} : vector<16x16xf32> to vector<16x8xf32>
    %cst_18 = arith.constant 0.000000e+00 : f32
    %27 = vector.broadcast %cst_18 : f32 to vector<16x8xf32>
    %28 = arith.maximumf %26, %27 : vector<16x8xf32>
    %29 = vector.broadcast %cst_18 : f32 to vector<16x8xf32>
    %30 = arith.subf %26, %29 : vector<16x8xf32>
    %31 = arith.cmpf one, %30, %30 : vector<16x8xf32>
    %32 = vector.broadcast %cst_18 : f32 to vector<16x8xf32>
    %33 = arith.addf %26, %32 : vector<16x8xf32>
    %34 = math.absf %30 : vector<16x8xf32>
    %cst_19 = arith.constant 0.000000e+00 : f32
    %35 = vector.broadcast %cst_19 : f32 to vector<16x8xf32>
    %36 = arith.subf %35, %34 : vector<16x8xf32>
    %37 = math.exp %36 : vector<16x8xf32>
    %38 = math.log1p %37 : vector<16x8xf32>
    %39 = arith.addf %28, %38 : vector<16x8xf32>
    %40 = arith.select %31, %33, %39 : vector<16x8xi1>, vector<16x8xf32>
    %cst_20 = arith.constant 1.000000e-07 : f32
    %41 = vector.broadcast %cst_20 : f32 to vector<16x8xf32>
    %42 = arith.maximumf %40, %41 : vector<16x8xf32>
    %43 = vector.shape_cast %42 : vector<16x8xf32> to vector<2x8x8xf32>
    %cst_21 = arith.constant 1.000000e+00 : f32
    %44 = vector.broadcast %cst_21 : f32 to vector<2x8x8xf32>
    %45 = arith.divf %44, %43 : vector<2x8x8xf32>
    %cst_22 = arith.constant dense<0.000000e+00> : vector<2x8xf32>
    %46 = vector.multi_reduction <add>, %45, %cst_22 [1] : vector<2x8x8xf32> to vector<2x8xf32>
    %cst_23 = arith.constant 1.000000e+00 : f32
    %47 = vector.broadcast %cst_23 : f32 to vector<2x8xf32>
    %48 = arith.divf %47, %46 : vector<2x8xf32>
    %49 = arith.mulf %25, %45 : vector<2x8x8xf32>
    %cst_24 = arith.constant dense<0.000000e+00> : vector<2x8xf32>
    %50 = vector.multi_reduction <add>, %49, %cst_24 [1] : vector<2x8x8xf32> to vector<2x8xf32>
    %51 = arith.mulf %48, %50 : vector<2x8xf32>
    %52 = math.sqrt %48 : vector<2x8xf32>
    %c0_25 = arith.constant 0 : index
    %c0_26 = arith.constant 0 : index
    %c0_27 = arith.constant 0 : index
    %53 = vector.load %arg3[%c0_25, %c0_26, %c0_27] : memref<2x1x8xf32, #tpu.memory_space<vmem>>, vector<2x1x8xf32>
    %54 = vector.shape_cast %53 : vector<2x1x8xf32> to vector<2x8xf32>
    %55 = arith.mulf %52, %54 : vector<2x8xf32>
    %56 = arith.addf %51, %55 : vector<2x8xf32>
    %cst_28 = arith.constant 0.000000e+00 : f32
    %57 = vector.broadcast %cst_28 : f32 to vector<2x104xf32>
    %58 = tpu.concatenate %51, %48, %56, %57 in 1 : vector<2x8xf32>, vector<2x8xf32>, vector<2x8xf32>, vector<2x104xf32> -> vector<2x128xf32>
    %59 = vector.shape_cast %58 : vector<2x128xf32> to vector<2x1x128xf32>
    %c0_29 = arith.constant 0 : index
    %c0_30 = arith.constant 0 : index
    %c0_31 = arith.constant 0 : index
    %60 = vector.load %arg18[%c0_29, %c0_30, %c0_31] : memref<2x1x128xf32, #tpu.memory_space<vmem>>, vector<2x1x128xf32>
    tpu.vector_store %arg18[%c0_29, %c0_30, %c0_31], %59 {strides = array<i32>} : memref<2x1x128xf32, #tpu.memory_space<vmem>>, vector<2x1x128xf32>,
    %c0_32 = arith.constant 0 : index
    %c0_33 = arith.constant 0 : index
    %c0_34 = arith.constant 0 : index
    %61 = vector.load %arg2[%c0_32, %c0_33, %c0_34] : memref<2x8x16xf32, #tpu.memory_space<vmem>>, vector<2x8x16xf32>
    %62 = vector.shape_cast %61 : vector<2x8x16xf32> to vector<16x16xf32>
    %63 = arith.truncf %62 : vector<16x16xf32> to vector<16x16xbf16>
    %c0_35 = arith.constant 0 : index
    %c0_36 = arith.constant 0 : index
    %64 = vector.load %arg11[%c0_35, %c0_36] : memref<16x32xbf16, #tpu.memory_space<vmem>>, vector<16x32xbf16>
    %cst_37 = arith.constant dense<0.000000e+00> : vector<16x32xf32>
    %65 = tpu.matmul %63, %64, %cst_37 {dimension_numbers = #tpu.dot_dimension_numbers<[1], [0], [0], [1], [0, 0, 1, 1], [], []>} : vector<16x16xbf16>, vector<16x32xbf16>, vector<16x32xf32> -> vector<16x32xf32>
    %66 = arith.truncf %56 : vector<2x8xf32> to vector<2x8xbf16>
    %c0_38 = arith.constant 0 : index
    %c0_39 = arith.constant 0 : index
    %67 = vector.load %arg12[%c0_38, %c0_39] : memref<8x32xbf16, #tpu.memory_space<vmem>>, vector<8x32xbf16>
    %cst_40 = arith.constant dense<0.000000e+00> : vector<2x32xf32>
    %68 = tpu.matmul %66, %67, %cst_40 {dimension_numbers = #tpu.dot_dimension_numbers<[1], [0], [0], [1], [0, 0, 1, 1], [], []>} : vector<2x8xbf16>, vector<8x32xbf16>, vector<2x32xf32> -> vector<2x32xf32>
    %69 = vector.shape_cast %65 : vector<16x32xf32> to vector<2x8x32xf32>
    %70 = vector.shape_cast %68 : vector<2x32xf32> to vector<2x1x32xf32>
    %71 = vector.broadcast %70 : vector<2x1x32xf32> to vector<2x8x32xf32>
    %72 = arith.addf %69, %71 : vector<2x8x32xf32>
    %c0_41 = arith.constant 0 : index
    %c0_42 = arith.constant 0 : index
    %73 = vector.load %arg13[%c0_41, %c0_42] : memref<1x32xf32, #tpu.memory_space<vmem>>, vector<1x32xf32>
    %74 = vector.shape_cast %73 : vector<1x32xf32> to vector<1x1x32xf32>
    %75 = vector.broadcast %74 : vector<1x1x32xf32> to vector<2x8x32xf32>
    %76 = arith.addf %72, %75 : vector<2x8x32xf32>
    %cst_43 = arith.constant 0.000000e+00 : f32
    %77 = vector.broadcast %cst_43 : f32 to vector<2x8x32xf32>
    %78 = arith.maximumf %76, %77 : vector<2x8x32xf32>
    %79 = vector.shape_cast %78 : vector<2x8x32xf32> to vector<16x32xf32>
    %80 = arith.truncf %79 : vector<16x32xf32> to vector<16x32xbf16>
    %c0_44 = arith.constant 0 : index
    %c0_45 = arith.constant 0 : index
    %81 = vector.load %arg14[%c0_44, %c0_45] : memref<32x32xbf16, #tpu.memory_space<vmem>>, vector<32x32xbf16>
    %cst_46 = arith.constant dense<0.000000e+00> : vector<16x32xf32>
    %82 = tpu.matmul %80, %81, %cst_46 {dimension_numbers = #tpu.dot_dimension_numbers<[1], [0], [0], [1], [0, 0, 1, 1], [], []>} : vector<16x32xbf16>, vector<32x32xbf16>, vector<16x32xf32> -> vector<16x32xf32>
    %c0_47 = arith.constant 0 : index
    %c0_48 = arith.constant 0 : index
    %83 = vector.load %arg15[%c0_47, %c0_48] : memref<1x32xf32, #tpu.memory_space<vmem>>, vector<1x32xf32>
    %84 = vector.broadcast %83 : vector<1x32xf32> to vector<16x32xf32>
    %85 = arith.addf %82, %84 : vector<16x32xf32>
    %cst_49 = arith.constant 0.000000e+00 : f32
    %86 = vector.broadcast %cst_49 : f32 to vector<16x32xf32>
    %87 = arith.maximumf %85, %86 : vector<16x32xf32>
    %88 = arith.truncf %87 : vector<16x32xf32> to vector<16x32xbf16>
    %c0_50 = arith.constant 0 : index
    %c0_51 = arith.constant 0 : index
    %89 = vector.load %arg16[%c0_50, %c0_51] : memref<32x8xbf16, #tpu.memory_space<vmem>>, vector<32x8xbf16>
    %cst_52 = arith.constant dense<0.000000e+00> : vector<16x8xf32>
    %90 = tpu.matmul %88, %89, %cst_52 {dimension_numbers = #tpu.dot_dimension_numbers<[1], [0], [0], [1], [0, 0, 1, 1], [], []>} : vector<16x32xbf16>, vector<32x8xbf16>, vector<16x8xf32> -> vector<16x8xf32>
    %c0_53 = arith.constant 0 : index
    %c0_54 = arith.constant 0 : index
    %91 = vector.load %arg17[%c0_53, %c0_54] : memref<1x8xf32, #tpu.memory_space<vmem>>, vector<1x8xf32>
    %92 = vector.broadcast %91 : vector<1x8xf32> to vector<16x8xf32>
    %93 = arith.addf %90, %92 : vector<16x8xf32>
    %94 = tpu.iota {dimensions = array<i32: 1>} : vector<16x8xi32>
    %c4_i32 = arith.constant 4 : i32
    %95 = vector.broadcast %c4_i32 : i32 to vector<16x8xi32>
    %96 = arith.cmpi sge, %94, %95 : vector<16x8xi32>
    %cst_55 = arith.constant -2.000000e+01 : f32
    %cst_56 = arith.constant 2.000000e+00 : f32
    %97 = vector.broadcast %cst_55 : f32 to vector<16x8xf32>
    %98 = arith.maximumf %97, %93 : vector<16x8xf32>
    %99 = vector.broadcast %cst_56 : f32 to vector<16x8xf32>
    %100 = arith.minimumf %99, %98 : vector<16x8xf32>
    %101 = arith.select %96, %100, %93 : vector<16x8xi1>, vector<16x8xf32>
    %102 = vector.extract_strided_slice %101 {offsets = [0, 0], sizes = [16, 4], strides = [1, 1]} : vector<16x8xf32> to vector<16x4xf32>
    %103 = vector.extract_strided_slice %101 {offsets = [0, 4], sizes = [16, 4], strides = [1, 1]} : vector<16x8xf32> to vector<16x4xf32>
    %104 = math.exp %103 : vector<16x4xf32>
    %c0_57 = arith.constant 0 : index
    %c0_58 = arith.constant 0 : index
    %c0_59 = arith.constant 0 : index
    %105 = vector.load %arg4[%c0_57, %c0_58, %c0_59] : memref<2x8x4xf32, #tpu.memory_space<vmem>>, vector<2x8x4xf32>
    %106 = vector.shape_cast %105 : vector<2x8x4xf32> to vector<16x4xf32>
    %107 = arith.mulf %104, %106 : vector<16x4xf32>
    %108 = arith.addf %102, %107 : vector<16x4xf32>
    %109 = math.tanh %108 : vector<16x4xf32>
    %110 = arith.mulf %106, %106 : vector<16x4xf32>
    %cst_60 = arith.constant -5.000000e-01 : f32
    %111 = vector.broadcast %cst_60 : f32 to vector<16x4xf32>
    %112 = arith.mulf %111, %110 : vector<16x4xf32>
    %113 = arith.subf %112, %103 : vector<16x4xf32>
    %cst_61 = arith.constant 6.28318548 : f32
    %114 = math.log %cst_61 : f32
    %cst_62 = arith.constant 5.000000e-01 : f32
    %115 = arith.mulf %cst_62, %114 : f32
    %116 = vector.broadcast %115 : f32 to vector<16x4xf32>
    %117 = arith.subf %113, %116 : vector<16x4xf32>
    %118 = arith.mulf %109, %109 : vector<16x4xf32>
    %cst_63 = arith.constant 1.000000e+00 : f32
    %119 = vector.broadcast %cst_63 : f32 to vector<16x4xf32>
    %120 = arith.subf %119, %118 : vector<16x4xf32>
    %cst_64 = arith.constant 9.99999997E-7 : f32
    %121 = vector.broadcast %cst_64 : f32 to vector<16x4xf32>
    %122 = arith.addf %120, %121 : vector<16x4xf32>
    %123 = math.log %122 : vector<16x4xf32>
    %124 = arith.subf %117, %123 : vector<16x4xf32>
    %cst_65 = arith.constant dense<0.000000e+00> : vector<16xf32>
    %125 = vector.multi_reduction <add>, %124, %cst_65 [1] : vector<16x4xf32> to vector<16xf32>
    %126 = vector.shape_cast %125 : vector<16xf32> to vector<16x1xf32>
    %cst_66 = arith.constant 0.000000e+00 : f32
    %127 = vector.broadcast %cst_66 : f32 to vector<16x111xf32>
    %128 = tpu.concatenate %101, %109, %108, %126, %127 in 1 : vector<16x8xf32>, vector<16x4xf32>, vector<16x4xf32>, vector<16x1xf32>, vector<16x111xf32> -> vector<16x128xf32>
    %129 = vector.shape_cast %128 : vector<16x128xf32> to vector<2x8x128xf32>
    %c0_67 = arith.constant 0 : index
    %c0_68 = arith.constant 0 : index
    %c0_69 = arith.constant 0 : index
    %130 = vector.load %arg19[%c0_67, %c0_68, %c0_69] : memref<2x8x128xf32, #tpu.memory_space<vmem>>, vector<2x8x128xf32>
    tpu.vector_store %arg19[%c0_67, %c0_68, %c0_69], %129 {strides = array<i32>} : memref<2x8x128xf32, #tpu.memory_space<vmem>>, vector<2x8x128xf32>,
    return
  }
  func.func @transform_0(%arg0: i32) -> (i32, i32, i32) {
    %c0_i32 = arith.constant 0 : i32
    %c0_i32_0 = arith.constant 0 : i32
    %c0_i32_1 = arith.constant 0 : i32
    return %arg0, %c0_i32, %c0_i32_0 : i32, i32, i32
  }
  func.func @transform_1(%arg0: i32) -> (i32, i32, i32) {
    %c0_i32 = arith.constant 0 : i32
    %c0_i32_0 = arith.constant 0 : i32
    %c0_i32_1 = arith.constant 0 : i32
    return %arg0, %c0_i32, %c0_i32_0 : i32, i32, i32
  }
  func.func @transform_2(%arg0: i32) -> (i32, i32, i32) {
    %c0_i32 = arith.constant 0 : i32
    %c0_i32_0 = arith.constant 0 : i32
    %c0_i32_1 = arith.constant 0 : i32
    return %arg0, %c0_i32, %c0_i32_0 : i32, i32, i32
  }
  func.func @transform_3(%arg0: i32) -> (i32, i32, i32) {
    %c0_i32 = arith.constant 0 : i32
    %c0_i32_0 = arith.constant 0 : i32
    %c0_i32_1 = arith.constant 0 : i32
    return %arg0, %c0_i32, %c0_i32_0 : i32, i32, i32
  }
  func.func @transform_4(%arg0: i32) -> (i32, i32) {
    %c0_i32 = arith.constant 0 : i32
    %c0_i32_0 = arith.constant 0 : i32
    %c0_i32_1 = arith.constant 0 : i32
    return %c0_i32, %c0_i32_0 : i32, i32
  }
  func.func @transform_5(%arg0: i32) -> (i32, i32) {
    %c0_i32 = arith.constant 0 : i32
    %c0_i32_0 = arith.constant 0 : i32
    %c0_i32_1 = arith.constant 0 : i32
    return %c0_i32, %c0_i32_0 : i32, i32
  }
  func.func @transform_6(%arg0: i32) -> (i32, i32) {
    %c0_i32 = arith.constant 0 : i32
    %c0_i32_0 = arith.constant 0 : i32
    %c0_i32_1 = arith.constant 0 : i32
    return %c0_i32, %c0_i32_0 : i32, i32
  }
  func.func @transform_7(%arg0: i32) -> (i32, i32) {
    %c0_i32 = arith.constant 0 : i32
    %c0_i32_0 = arith.constant 0 : i32
    %c0_i32_1 = arith.constant 0 : i32
    return %c0_i32, %c0_i32_0 : i32, i32
  }
  func.func @transform_8(%arg0: i32) -> (i32, i32) {
    %c0_i32 = arith.constant 0 : i32
    %c0_i32_0 = arith.constant 0 : i32
    %c0_i32_1 = arith.constant 0 : i32
    return %c0_i32, %c0_i32_0 : i32, i32
  }
  func.func @transform_9(%arg0: i32) -> (i32, i32) {
    %c0_i32 = arith.constant 0 : i32
    %c0_i32_0 = arith.constant 0 : i32
    %c0_i32_1 = arith.constant 0 : i32
    return %c0_i32, %c0_i32_0 : i32, i32
  }
  func.func @transform_10(%arg0: i32) -> (i32, i32) {
    %c0_i32 = arith.constant 0 : i32
    %c0_i32_0 = arith.constant 0 : i32
    %c0_i32_1 = arith.constant 0 : i32
    return %c0_i32, %c0_i32_0 : i32, i32
  }
  func.func @transform_11(%arg0: i32) -> (i32, i32) {
    %c0_i32 = arith.constant 0 : i32
    %c0_i32_0 = arith.constant 0 : i32
    %c0_i32_1 = arith.constant 0 : i32
    return %c0_i32, %c0_i32_0 : i32, i32
  }
  func.func @transform_12(%arg0: i32) -> (i32, i32) {
    %c0_i32 = arith.constant 0 : i32
    %c0_i32_0 = arith.constant 0 : i32
    %c0_i32_1 = arith.constant 0 : i32
    return %c0_i32, %c0_i32_0 : i32, i32
  }
  func.func @transform_13(%arg0: i32) -> (i32, i32) {
    %c0_i32 = arith.constant 0 : i32
    %c0_i32_0 = arith.constant 0 : i32
    %c0_i32_1 = arith.constant 0 : i32
    return %c0_i32, %c0_i32_0 : i32, i32
  }
  func.func @transform_14(%arg0: i32) -> (i32, i32) {
    %c0_i32 = arith.constant 0 : i32
    %c0_i32_0 = arith.constant 0 : i32
    %c0_i32_1 = arith.constant 0 : i32
    return %c0_i32, %c0_i32_0 : i32, i32
  }
  func.func @transform_15(%arg0: i32) -> (i32, i32) {
    %c0_i32 = arith.constant 0 : i32
    %c0_i32_0 = arith.constant 0 : i32
    %c0_i32_1 = arith.constant 0 : i32
    return %c0_i32, %c0_i32_0 : i32, i32
  }
  func.func @transform_16(%arg0: i32) -> (i32, i32) {
    %c0_i32 = arith.constant 0 : i32
    %c0_i32_0 = arith.constant 0 : i32
    %c0_i32_1 = arith.constant 0 : i32
    return %c0_i32, %c0_i32_0 : i32, i32
  }
  func.func @transform_17(%arg0: i32) -> (i32, i32, i32) {
    %c0_i32 = arith.constant 0 : i32
    %c0_i32_0 = arith.constant 0 : i32
    %c0_i32_1 = arith.constant 0 : i32
    return %arg0, %c0_i32, %c0_i32_0 : i32, i32, i32
  }
  func.func @transform_18(%arg0: i32) -> (i32, i32, i32) {
    %c0_i32 = arith.constant 0 : i32
    %c0_i32_0 = arith.constant 0 : i32
    %c0_i32_1 = arith.constant 0 : i32
    return %arg0, %c0_i32, %c0_i32_0 : i32, i32, i32
  }
}

</mosaic_0001>

<llo_original>
// kernel: _pearl_forward.3
$region0: #{_pearl_forward.3}
  #allocation0 [shape = 'u32[]', space=smem, size = 0x4, offset = 0x4, fixed_abs, tag = 'smem constant byte address 0x4 - core index']
  #allocation1 [shape = 'u32[144,128]{1,0:T(1,128)}', space=vmem, size = 0x12000, scoped, tag = 'internal scratch']
  %s0 = inlined_call_operand.vmem [shape: f32[4,8,21], index: 0, kind: input, shape index: {}]
  %s1 = inlined_call_operand.vmem [shape: f32[4,8,16], index: 1, kind: input, shape index: {}]
  %s2 = inlined_call_operand.vmem [shape: f32[4,1,8], index: 2, kind: input, shape index: {}]
  %s3 = inlined_call_operand.vmem [shape: f32[4,8,4], index: 3, kind: input, shape index: {}]
  %s4 = inlined_call_operand.vmem [shape: bf16[21,32], index: 4, kind: input, shape index: {}]
  %s5 = inlined_call_operand.vmem [shape: f32[1,32], index: 5, kind: input, shape index: {}]
  %s6 = inlined_call_operand.vmem [shape: bf16[32,32], index: 6, kind: input, shape index: {}]
  %s7 = inlined_call_operand.vmem [shape: f32[1,32], index: 7, kind: input, shape index: {}]
  %s8 = inlined_call_operand.vmem [shape: bf16[32,16], index: 8, kind: input, shape index: {}]
  %s9 = inlined_call_operand.vmem [shape: f32[1,16], index: 9, kind: input, shape index: {}]
  %s10 = inlined_call_operand.vmem [shape: bf16[16,32], index: 10, kind: input, shape index: {}]
  %s11 = inlined_call_operand.vmem [shape: bf16[8,32], index: 11, kind: input, shape index: {}]
  %s12 = inlined_call_operand.vmem [shape: f32[1,32], index: 12, kind: input, shape index: {}]
  %s13 = inlined_call_operand.vmem [shape: bf16[32,32], index: 13, kind: input, shape index: {}]
  %s14 = inlined_call_operand.vmem [shape: f32[1,32], index: 14, kind: input, shape index: {}]
  %s15 = inlined_call_operand.vmem [shape: bf16[32,8], index: 15, kind: input, shape index: {}]
  %s16 = inlined_call_operand.vmem [shape: f32[1,8], index: 16, kind: input, shape index: {}]
  %s17 = inlined_call_operand.vmem [shape: f32[4,1,128], index: 17, kind: output, shape index: {0}]
  %s18 = inlined_call_operand.vmem [shape: f32[4,8,128], index: 18, kind: output, shape index: {1}]
  %19 = xla_tuple %s17, %s18
  %s20 = sld [smem:[#allocation0]]
  $region109: #{_pearl_forward.3} parent=0
    _
  %s22 = ssub.s32 1, %s20
  %s23 = scalar_select 0, %s22, %s20
  loop: start=0, step=1, limit=4
  $region2: #{_pearl_forward.3} parent=0 // loop_pre_header
    _
  $region3: #{_pearl_forward.3} parent=0 // loop_header
    %s25 = sphi 0, %s29
    %p26 = scmp.ge.s32.totalorder %s25, 4
    %s35 = sphi 0, %s37
    %s38 = sphi 0, %s35
    %s39 = sphi 0, %s38
    %s55 = sphi 0, %s39
    %s61 = sphi 0, %s63
    %s64 = sphi 0, %s61
    %s65 = sphi 0, %s64
    %s81 = sphi 0, %s65
    %s87 = sphi 0, %s89
    %s90 = sphi 0, %s87
    %s91 = sphi 0, %s90
    %s107 = sphi 0, %s91
    %s113 = sphi 0, %s115
    %s116 = sphi 0, %s113
    %s117 = sphi 0, %s116
    %s133 = sphi 0, %s117
    %s137 = sphi 0, %s137
    %s139 = sphi 0, %s137
    %s140 = sphi 0, %s139
    %s154 = sphi 0, %s140
    %s158 = sphi 0, %s158
    %s160 = sphi 0, %s158
    %s161 = sphi 0, %s160
    %s175 = sphi 0, %s161
    %s179 = sphi 0, %s179
    %s181 = sphi 0, %s179
    %s182 = sphi 0, %s181
    %s196 = sphi 0, %s182
    %s200 = sphi 0, %s200
    %s202 = sphi 0, %s200
    %s203 = sphi 0, %s202
    %s217 = sphi 0, %s203
    %s221 = sphi 0, %s221
    %s223 = sphi 0, %s221
    %s224 = sphi 0, %s223
    %s238 = sphi 0, %s224
    %s242 = sphi 0, %s242
    %s244 = sphi 0, %s242
    %s245 = sphi 0, %s244
    %s259 = sphi 0, %s245
    %s263 = sphi 0, %s263
    %s265 = sphi 0, %s263
    %s266 = sphi 0, %s265
    %s280 = sphi 0, %s266
    %s284 = sphi 0, %s284
    %s286 = sphi 0, %s284
    %s287 = sphi 0, %s286
    %s301 = sphi 0, %s287
    %s305 = sphi 0, %s305
    %s307 = sphi 0, %s305
    %s308 = sphi 0, %s307
    %s322 = sphi 0, %s308
    %s326 = sphi 0, %s326
    %s328 = sphi 0, %s326
    %s329 = sphi 0, %s328
    %s343 = sphi 0, %s329
    %s347 = sphi 0, %s347
    %s349 = sphi 0, %s347
    %s350 = sphi 0, %s349
    %s364 = sphi 0, %s350
    %s368 = sphi 0, %s368
    %s370 = sphi 0, %s368
    %s371 = sphi 0, %s370
    %s385 = sphi 0, %s371
    %s389 = sphi 0, %s389
    %s391 = sphi 0, %s389
    %s392 = sphi 0, %s391
    %s406 = sphi 0, %s392
    %s412 = sphi 0, %s414
    %s415 = sphi 0, %s412
    %s416 = sphi 0, %s415
    %s432 = sphi 0, %s416
    %s438 = sphi 0, %s440
    %s441 = sphi 0, %s438
    %s442 = sphi 0, %s441
    %s458 = sphi 0, %s442
  $region4: #{_pearl_forward.3} parent=0 // loop_header_branch
    %28 = sbr.rel (%p26) target = $region8
  $region5: #{_pearl_forward.3} parent=0 // loop_body
    %s30 = ssub.s32 %s25, 1
    %s31 = ssub.s32 %s25, 2
    %s32 = sadd.s32 %s25, 1
    %s33 = ssub.s32 %s25, %s32
    %p34 = scmp.eq.s32.totalorder %s33, 0
    %s36 = sadd.s32 %s35, 1
    %s37 = scalar_select %p34, %s35, %s36
    %p40 = pneg %p34
    %p41 = scmp.eq.s32.totalorder %s25, 1
    %p42 = por %p40, %p41
    %p43 = scmp.ne.s32.totalorder %s35, %s38
    %p44 = scmp.eq.s32.totalorder %s25, 0
    %p45 = por %p43, %p44
    %p46 = scmp.ne.s32.totalorder %s35, %s38
    %p47 = scmp.eq.s32.totalorder %s30, 1
    %p48 = por %p46, %p47
    %p49 = scmp.ne.s32.totalorder %s38, %s39
    %p50 = scmp.eq.s32.totalorder %s30, 0
    %p51 = por %p49, %p50
    %p52 = scmp.ne.s32.totalorder %s38, %s39
    %p53 = scmp.eq.s32.totalorder %s31, 1
    %p54 = por %p52, %p53
    %p56 = scmp.ne.s32.totalorder %s39, %s55
    %p57 = scmp.eq.s32.totalorder %s31, 0
    %p58 = por %p56, %p57
    %s59 = ssub.s32 %s25, %s32
    %p60 = scmp.eq.s32.totalorder %s59, 0
    %s62 = sadd.s32 %s61, 1
    %s63 = scalar_select %p60, %s61, %s62
    %p66 = pneg %p60
    %p67 = scmp.eq.s32.totalorder %s25, 1
    %p68 = por %p66, %p67
    %p69 = scmp.ne.s32.totalorder %s61, %s64
    %p70 = scmp.eq.s32.totalorder %s25, 0
    %p71 = por %p69, %p70
    %p72 = scmp.ne.s32.totalorder %s61, %s64
    %p73 = scmp.eq.s32.totalorder %s30, 1
    %p74 = por %p72, %p73
    %p75 = scmp.ne.s32.totalorder %s64, %s65
    %p76 = scmp.eq.s32.totalorder %s30, 0
    %p77 = por %p75, %p76
    %p78 = scmp.ne.s32.totalorder %s64, %s65
    %p79 = scmp.eq.s32.totalorder %s31, 1
    %p80 = por %p78, %p79
    %p82 = scmp.ne.s32.totalorder %s65, %s81
    %p83 = scmp.eq.s32.totalorder %s31, 0
    %p84 = por %p82, %p83
    %s85 = ssub.s32 %s25, %s32
    %p86 = scmp.eq.s32.totalorder %s85, 0
    %s88 = sadd.s32 %s87, 1
    %s89 = scalar_select %p86, %s87, %s88
    %p92 = pneg %p86
    %p93 = scmp.eq.s32.totalorder %s25, 1
    %p94 = por %p92, %p93
    %p95 = scmp.ne.s32.totalorder %s87, %s90
    %p96 = scmp.eq.s32.totalorder %s25, 0
    %p97 = por %p95, %p96
    %p98 = scmp.ne.s32.totalorder %s87, %s90
    %p99 = scmp.eq.s32.totalorder %s30, 1
    %p100 = por %p98, %p99
    %p101 = scmp.ne.s32.totalorder %s90, %s91
    %p102 = scmp.eq.s32.totalorder %s30, 0
    %p103 = por %p101, %p102
    %p104 = scmp.ne.s32.totalorder %s90, %s91
    %p105 = scmp.eq.s32.totalorder %s31, 1
    %p106 = por %p104, %p105
    %p108 = scmp.ne.s32.totalorder %s91, %s107
    %p109 = scmp.eq.s32.totalorder %s31, 0
    %p110 = por %p108, %p109
    %s111 = ssub.s32 %s25, %s32
    %p112 = scmp.eq.s32.totalorder %s111, 0
    %s114 = sadd.s32 %s113, 1
    %s115 = scalar_select %p112, %s113, %s114
    %p118 = pneg %p112
    %p119 = scmp.eq.s32.totalorder %s25, 1
    %p120 = por %p118, %p119
    %p121 = scmp.ne.s32.totalorder %s113, %s116
    %p122 = scmp.eq.s32.totalorder %s25, 0
    %p123 = por %p121, %p122
    %p124 = scmp.ne.s32.totalorder %s113, %s116
    %p125 = scmp.eq.s32.totalorder %s30, 1
    %p126 = por %p124, %p125
    %p127 = scmp.ne.s32.totalorder %s116, %s117
    %p128 = scmp.eq.s32.totalorder %s30, 0
    %p129 = por %p127, %p128
    %p130 = scmp.ne.s32.totalorder %s116, %s117
    %p131 = scmp.eq.s32.totalorder %s31, 1
    %p132 = por %p130, %p131
    %p134 = scmp.ne.s32.totalorder %s117, %s133
    %p135 = scmp.eq.s32.totalorder %s31, 0
    %p136 = por %p134, %p135
    %s138 = sadd.s32 %s137, 1
    %p141 = scmp.eq.s32.totalorder %s25, 1
    %p142 = scmp.ne.s32.totalorder %s137, %s139
    %p143 = scmp.eq.s32.totalorder %s25, 0
    %p144 = por %p142, %p143
    %p145 = scmp.ne.s32.totalorder %s137, %s139
    %p146 = scmp.eq.s32.totalorder %s30, 1
    %p147 = por %p145, %p146
    %p148 = scmp.ne.s32.totalorder %s139, %s140
    %p149 = scmp.eq.s32.totalorder %s30, 0
    %p150 = por %p148, %p149
    %p151 = scmp.ne.s32.totalorder %s139, %s140
    %p152 = scmp.eq.s32.totalorder %s31, 1
    %p153 = por %p151, %p152
    %p155 = scmp.ne.s32.totalorder %s140, %s154
    %p156 = scmp.eq.s32.totalorder %s31, 0
    %p157 = por %p155, %p156
    %s159 = sadd.s32 %s158, 1
    %p162 = scmp.eq.s32.totalorder %s25, 1
    %p163 = scmp.ne.s32.totalorder %s158, %s160
    %p164 = scmp.eq.s32.totalorder %s25, 0
    %p165 = por %p163, %p164
    %p166 = scmp.ne.s32.totalorder %s158, %s160
    %p167 = scmp.eq.s32.totalorder %s30, 1
    %p168 = por %p166, %p167
    %p169 = scmp.ne.s32.totalorder %s160, %s161
    %p170 = scmp.eq.s32.totalorder %s30, 0
    %p171 = por %p169, %p170
    %p172 = scmp.ne.s32.totalorder %s160, %s161
    %p173 = scmp.eq.s32.totalorder %s31, 1
    %p174 = por %p172, %p173
    %p176 = scmp.ne.s32.totalorder %s161, %s175
    %p177 = scmp.eq.s32.totalorder %s31, 0
    %p178 = por %p176, %p177
    %s180 = sadd.s32 %s179, 1
    %p183 = scmp.eq.s32.totalorder %s25, 1
    %p184 = scmp.ne.s32.totalorder %s179, %s181
    %p185 = scmp.eq.s32.totalorder %s25, 0
    %p186 = por %p184, %p185
    %p187 = scmp.ne.s32.totalorder %s179, %s181
    %p188 = scmp.eq.s32.totalorder %s30, 1
    %p189 = por %p187, %p188
    %p190 = scmp.ne.s32.totalorder %s181, %s182
    %p191 = scmp.eq.s32.totalorder %s30, 0
    %p192 = por %p190, %p191
    %p193 = scmp.ne.s32.totalorder %s181, %s182
    %p194 = scmp.eq.s32.totalorder %s31, 1
    %p195 = por %p193, %p194
    %p197 = scmp.ne.s32.totalorder %s182, %s196
    %p198 = scmp.eq.s32.totalorder %s31, 0
    %p199 = por %p197, %p198
    %s201 = sadd.s32 %s200, 1
    %p204 = scmp.eq.s32.totalorder %s25, 1
    %p205 = scmp.ne.s32.totalorder %s200, %s202
    %p206 = scmp.eq.s32.totalorder %s25, 0
    %p207 = por %p205, %p206
    %p208 = scmp.ne.s32.totalorder %s200, %s202
    %p209 = scmp.eq.s32.totalorder %s30, 1
    %p210 = por %p208, %p209
    %p211 = scmp.ne.s32.totalorder %s202, %s203
    %p212 = scmp.eq.s32.totalorder %s30, 0
    %p213 = por %p211, %p212
    %p214 = scmp.ne.s32.totalorder %s202, %s203
    %p215 = scmp.eq.s32.totalorder %s31, 1
    %p216 = por %p214, %p215
    %p218 = scmp.ne.s32.totalorder %s203, %s217
    %p219 = scmp.eq.s32.totalorder %s31, 0
    %p220 = por %p218, %p219
    %s222 = sadd.s32 %s221, 1
    %p225 = scmp.eq.s32.totalorder %s25, 1
    %p226 = scmp.ne.s32.totalorder %s221, %s223
    %p227 = scmp.eq.s32.totalorder %s25, 0
    %p228 = por %p226, %p227
    %p229 = scmp.ne.s32.totalorder %s221, %s223
    %p230 = scmp.eq.s32.totalorder %s30, 1
    %p231 = por %p229, %p230
    %p232 = scmp.ne.s32.totalorder %s223, %s224
    %p233 = scmp.eq.s32.totalorder %s30, 0
    %p234 = por %p232, %p233
    %p235 = scmp.ne.s32.totalorder %s223, %s224
    %p236 = scmp.eq.s32.totalorder %s31, 1
    %p237 = por %p235, %p236
    %p239 = scmp.ne.s32.totalorder %s224, %s238
    %p240 = scmp.eq.s32.totalorder %s31, 0
    %p241 = por %p239, %p240
    %s243 = sadd.s32 %s242, 1
    %p246 = scmp.eq.s32.totalorder %s25, 1
    %p247 = scmp.ne.s32.totalorder %s242, %s244
    %p248 = scmp.eq.s32.totalorder %s25, 0
    %p249 = por %p247, %p248
    %p250 = scmp.ne.s32.totalorder %s242, %s244
    %p251 = scmp.eq.s32.totalorder %s30, 1
    %p252 = por %p250, %p251
    %p253 = scmp.ne.s32.totalorder %s244, %s245
    %p254 = scmp.eq.s32.totalorder %s30, 0
    %p255 = por %p253, %p254
    %p256 = scmp.ne.s32.totalorder %s244, %s245
    %p257 = scmp.eq.s32.totalorder %s31, 1
    %p258 = por %p256, %p257
    %p260 = scmp.ne.s32.totalorder %s245, %s259
    %p261 = scmp.eq.s32.totalorder %s31, 0
    %p262 = por %p260, %p261
    %s264 = sadd.s32 %s263, 1
    %p267 = scmp.eq.s32.totalorder %s25, 1
    %p268 = scmp.ne.s32.totalorder %s263, %s265
    %p269 = scmp.eq.s32.totalorder %s25, 0
    %p270 = por %p268, %p269
    %p271 = scmp.ne.s32.totalorder %s263, %s265
    %p272 = scmp.eq.s32.totalorder %s30, 1
    %p273 = por %p271, %p272
    %p274 = scmp.ne.s32.totalorder %s265, %s266
    %p275 = scmp.eq.s32.totalorder %s30, 0
    %p276 = por %p274, %p275
    %p277 = scmp.ne.s32.totalorder %s265, %s266
    %p278 = scmp.eq.s32.totalorder %s31, 1
    %p279 = por %p277, %p278
    %p281 = scmp.ne.s32.totalorder %s266, %s280
    %p282 = scmp.eq.s32.totalorder %s31, 0
    %p283 = por %p281, %p282
    %s285 = sadd.s32 %s284, 1
    %p288 = scmp.eq.s32.totalorder %s25, 1
    %p289 = scmp.ne.s32.totalorder %s284, %s286
    %p290 = scmp.eq.s32.totalorder %s25, 0
    %p291 = por %p289, %p290
    %p292 = scmp.ne.s32.totalorder %s284, %s286
    %p293 = scmp.eq.s32.totalorder %s30, 1
    %p294 = por %p292, %p293
    %p295 = scmp.ne.s32.totalorder %s286, %s287
    %p296 = scmp.eq.s32.totalorder %s30, 0
    %p297 = por %p295, %p296
    %p298 = scmp.ne.s32.totalorder %s286, %s287
    %p299 = scmp.eq.s32.totalorder %s31, 1
    %p300 = por %p298, %p299
    %p302 = scmp.ne.s32.totalorder %s287, %s301
    %p303 = scmp.eq.s32.totalorder %s31, 0
    %p304 = por %p302, %p303
    %s306 = sadd.s32 %s305, 1
    %p309 = scmp.eq.s32.totalorder %s25, 1
    %p310 = scmp.ne.s32.totalorder %s305, %s307
    %p311 = scmp.eq.s32.totalorder %s25, 0
    %p312 = por %p310, %p311
    %p313 = scmp.ne.s32.totalorder %s305, %s307
    %p314 = scmp.eq.s32.totalorder %s30, 1
    %p315 = por %p313, %p314
    %p316 = scmp.ne.s32.totalorder %s307, %s308
    %p317 = scmp.eq.s32.totalorder %s30, 0
    %p318 = por %p316, %p317
    %p319 = scmp.ne.s32.totalorder %s307, %s308
    %p320 = scmp.eq.s32.totalorder %s31, 1
    %p321 = por %p319, %p320
    %p323 = scmp.ne.s32.totalorder %s308, %s322
    %p324 = scmp.eq.s32.totalorder %s31, 0
    %p325 = por %p323, %p324
    %s327 = sadd.s32 %s326, 1
    %p330 = scmp.eq.s32.totalorder %s25, 1
    %p331 = scmp.ne.s32.totalorder %s326, %s328
    %p332 = scmp.eq.s32.totalorder %s25, 0
    %p333 = por %p331, %p332
    %p334 = scmp.ne.s32.totalorder %s326, %s328
    %p335 = scmp.eq.s32.totalorder %s30, 1
    %p336 = por %p334, %p335
    %p337 = scmp.ne.s32.totalorder %s328, %s329
    %p338 = scmp.eq.s32.totalorder %s30, 0
    %p339 = por %p337, %p338
    %p340 = scmp.ne.s32.totalorder %s328, %s329
    %p341 = scmp.eq.s32.totalorder %s31, 1
    %p342 = por %p340, %p341
    %p344 = scmp.ne.s32.totalorder %s329, %s343
    %p345 = scmp.eq.s32.totalorder %s31, 0
    %p346 = por %p344, %p345
    %s348 = sadd.s32 %s347, 1
    %p351 = scmp.eq.s32.totalorder %s25, 1
    %p352 = scmp.ne.s32.totalorder %s347, %s349
    %p353 = scmp.eq.s32.totalorder %s25, 0
    %p354 = por %p352, %p353
    %p355 = scmp.ne.s32.totalorder %s347, %s349
    %p356 = scmp.eq.s32.totalorder %s30, 1
    %p357 = por %p355, %p356
    %p358 = scmp.ne.s32.totalorder %s349, %s350
    %p359 = scmp.eq.s32.totalorder %s30, 0
    %p360 = por %p358, %p359
    %p361 = scmp.ne.s32.totalorder %s349, %s350
    %p362 = scmp.eq.s32.totalorder %s31, 1
    %p363 = por %p361, %p362
    %p365 = scmp.ne.s32.totalorder %s350, %s364
    %p366 = scmp.eq.s32.totalorder %s31, 0
    %p367 = por %p365, %p366
    %s369 = sadd.s32 %s368, 1
    %p372 = scmp.eq.s32.totalorder %s25, 1
    %p373 = scmp.ne.s32.totalorder %s368, %s370
    %p374 = scmp.eq.s32.totalorder %s25, 0
    %p375 = por %p373, %p374
    %p376 = scmp.ne.s32.totalorder %s368, %s370
    %p377 = scmp.eq.s32.totalorder %s30, 1
    %p378 = por %p376, %p377
    %p379 = scmp.ne.s32.totalorder %s370, %s371
    %p380 = scmp.eq.s32.totalorder %s30, 0
    %p381 = por %p379, %p380
    %p382 = scmp.ne.s32.totalorder %s370, %s371
    %p383 = scmp.eq.s32.totalorder %s31, 1
    %p384 = por %p382, %p383
    %p386 = scmp.ne.s32.totalorder %s371, %s385
    %p387 = scmp.eq.s32.totalorder %s31, 0
    %p388 = por %p386, %p387
    %s390 = sadd.s32 %s389, 1
    %p393 = scmp.eq.s32.totalorder %s25, 1
    %p394 = scmp.ne.s32.totalorder %s389, %s391
    %p395 = scmp.eq.s32.totalorder %s25, 0
    %p396 = por %p394, %p395
    %p397 = scmp.ne.s32.totalorder %s389, %s391
    %p398 = scmp.eq.s32.totalorder %s30, 1
    %p399 = por %p397, %p398
    %p400 = scmp.ne.s32.totalorder %s391, %s392
    %p401 = scmp.eq.s32.totalorder %s30, 0
    %p402 = por %p400, %p401
    %p403 = scmp.ne.s32.totalorder %s391, %s392
    %p404 = scmp.eq.s32.totalorder %s31, 1
    %p405 = por %p403, %p404
    %p407 = scmp.ne.s32.totalorder %s392, %s406
    %p408 = scmp.eq.s32.totalorder %s31, 0
    %p409 = por %p407, %p408
    %s410 = ssub.s32 %s25, %s32
    %p411 = scmp.eq.s32.totalorder %s410, 0
    %s413 = sadd.s32 %s412, 1
    %s414 = scalar_select %p411, %s412, %s413
    %p417 = pneg %p411
    %p418 = scmp.eq.s32.totalorder %s25, 1
    %p419 = por %p417, %p418
    %p420 = scmp.ne.s32.totalorder %s412, %s415
    %p421 = scmp.eq.s32.totalorder %s25, 0
    %p422 = por %p420, %p421
    %p423 = scmp.ne.s32.totalorder %s412, %s415
    %p424 = scmp.eq.s32.totalorder %s30, 1
    %p425 = por %p423, %p424
    %p426 = scmp.ne.s32.totalorder %s415, %s416
    %p427 = scmp.eq.s32.totalorder %s30, 0
    %p428 = por %p426, %p427
    %p429 = scmp.ne.s32.totalorder %s415, %s416
    %p430 = scmp.eq.s32.totalorder %s31, 1
    %p431 = por %p429, %p430
    %p433 = scmp.ne.s32.totalorder %s416, %s432
    %p434 = scmp.eq.s32.totalorder %s31, 0
    %p435 = por %p433, %p434
    %s436 = ssub.s32 %s25, %s32
    %p437 = scmp.eq.s32.totalorder %s436, 0
    %s439 = sadd.s32 %s438, 1
    %s440 = scalar_select %p437, %s438, %s439
    %p443 = pneg %p437
    %p444 = scmp.eq.s32.totalorder %s25, 1
    %p445 = por %p443, %p444
    %p446 = scmp.ne.s32.totalorder %s438, %s441
    %p447 = scmp.eq.s32.totalorder %s25, 0
    %p448 = por %p446, %p447
    %p449 = scmp.ne.s32.totalorder %s438, %s441
    %p450 = scmp.eq.s32.totalorder %s30, 1
    %p451 = por %p449, %p450
    %p452 = scmp.ne.s32.totalorder %s441, %s442
    %p453 = scmp.eq.s32.totalorder %s30, 0
    %p454 = por %p452, %p453
    %p455 = scmp.ne.s32.totalorder %s441, %s442
    %p456 = scmp.eq.s32.totalorder %s31, 1
    %p457 = por %p455, %p456
    %p459 = scmp.ne.s32.totalorder %s442, %s458
    %p460 = scmp.eq.s32.totalorder %s31, 0
    %p461 = por %p459, %p460
    %p462 = scmp.le.s32.totalorder 1, %s25
    %p463 = scmp.lt.s32.totalorder %s25, 3
    %p464 = pnand %p462, %p463
    %p465 = pneg %p464
    // Predicated region
    $region9: #{_pearl_forward.3} parent=5 // pred_check
      _
    $region10: #{_pearl_forward.3} parent=5 // pred_check_branch
      %467 = sbr.rel (%p464) target = $region12
    $region11: #{_pearl_forward.3} parent=5 // pred_region
      %s468 = ssub.s32 %s25, 1
      // Predicated region
      $region13: #{_pearl_forward.3} parent=11 // pred_check
        %p469 = pneg %p150
      $region14: #{_pearl_forward.3} parent=11 // pred_check_branch
        %471 = sbr.rel (%p469) target = $region16
      $region15: #{_pearl_forward.3} parent=11 // pred_region
        _
      $region16: #{_pearl_forward.3} parent=11 // pred_fallthru
        _
      // Predicated region
      $region17: #{_pearl_forward.3} parent=11 // pred_check
        %p472 = pneg %p171
      $region18: #{_pearl_forward.3} parent=11 // pred_check_branch
        %474 = sbr.rel (%p472) target = $region20
      $region19: #{_pearl_forward.3} parent=11 // pred_region
        _
      $region20: #{_pearl_forward.3} parent=11 // pred_fallthru
        _
      // Predicated region
      $region21: #{_pearl_forward.3} parent=11 // pred_check
        %p475 = pneg %p192
      $region22: #{_pearl_forward.3} parent=11 // pred_check_branch
        %477 = sbr.rel (%p475) target = $region24
      $region23: #{_pearl_forward.3} parent=11 // pred_region
        _
      $region24: #{_pearl_forward.3} parent=11 // pred_fallthru
        _
      // Predicated region
      $region25: #{_pearl_forward.3} parent=11 // pred_check
        %p478 = pneg %p213
      $region26: #{_pearl_forward.3} parent=11 // pred_check_branch
        %480 = sbr.rel (%p478) target = $region28
      $region27: #{_pearl_forward.3} parent=11 // pred_region
        _
      $region28: #{_pearl_forward.3} parent=11 // pred_fallthru
        _
      // Predicated region
      $region29: #{_pearl_forward.3} parent=11 // pred_check
        %p481 = pneg %p234
      $region30: #{_pearl_forward.3} parent=11 // pred_check_branch
        %483 = sbr.rel (%p481) target = $region32
      $region31: #{_pearl_forward.3} parent=11 // pred_region
        _
      $region32: #{_pearl_forward.3} parent=11 // pred_fallthru
        _
      // Predicated region
      $region33: #{_pearl_forward.3} parent=11 // pred_check
        %p484 = pneg %p255
      $region34: #{_pearl_forward.3} parent=11 // pred_check_branch
        %486 = sbr.rel (%p484) target = $region36
      $region35: #{_pearl_forward.3} parent=11 // pred_region
        _
      $region36: #{_pearl_forward.3} parent=11 // pred_fallthru
        _
      // Predicated region
      $region37: #{_pearl_forward.3} parent=11 // pred_check
        %p487 = pneg %p276
      $region38: #{_pearl_forward.3} parent=11 // pred_check_branch
        %489 = sbr.rel (%p487) target = $region40
      $region39: #{_pearl_forward.3} parent=11 // pred_region
        _
      $region40: #{_pearl_forward.3} parent=11 // pred_fallthru
        _
      // Predicated region
      $region41: #{_pearl_forward.3} parent=11 // pred_check
        %p490 = pneg %p297
      $region42: #{_pearl_forward.3} parent=11 // pred_check_branch
        %492 = sbr.rel (%p490) target = $region44
      $region43: #{_pearl_forward.3} parent=11 // pred_region
        _
      $region44: #{_pearl_forward.3} parent=11 // pred_fallthru
        _
      // Predicated region
      $region45: #{_pearl_forward.3} parent=11 // pred_check
        %p493 = pneg %p318
      $region46: #{_pearl_forward.3} parent=11 // pred_check_branch
        %495 = sbr.rel (%p493) target = $region48
      $region47: #{_pearl_forward.3} parent=11 // pred_region
        _
      $region48: #{_pearl_forward.3} parent=11 // pred_fallthru
        _
      // Predicated region
      $region49: #{_pearl_forward.3} parent=11 // pred_check
        %p496 = pneg %p339
      $region50: #{_pearl_forward.3} parent=11 // pred_check_branch
        %498 = sbr.rel (%p496) target = $region52
      $region51: #{_pearl_forward.3} parent=11 // pred_region
        _
      $region52: #{_pearl_forward.3} parent=11 // pred_fallthru
        _
      // Predicated region
      $region53: #{_pearl_forward.3} parent=11 // pred_check
        %p499 = pneg %p360
      $region54: #{_pearl_forward.3} parent=11 // pred_check_branch
        %501 = sbr.rel (%p499) target = $region56
      $region55: #{_pearl_forward.3} parent=11 // pred_region
        _
      $region56: #{_pearl_forward.3} parent=11 // pred_fallthru
        _
      // Predicated region
      $region57: #{_pearl_forward.3} parent=11 // pred_check
        %p502 = pneg %p381
      $region58: #{_pearl_forward.3} parent=11 // pred_check_branch
        %504 = sbr.rel (%p502) target = $region60
      $region59: #{_pearl_forward.3} parent=11 // pred_region
        _
      $region60: #{_pearl_forward.3} parent=11 // pred_fallthru
        _
      // Predicated region
      $region61: #{_pearl_forward.3} parent=11 // pred_check
        %p505 = pneg %p402
      $region62: #{_pearl_forward.3} parent=11 // pred_check_branch
        %507 = sbr.rel (%p505) target = $region64
      $region63: #{_pearl_forward.3} parent=11 // pred_region
        _
      $region64: #{_pearl_forward.3} parent=11 // pred_fallthru
        _
    $region12: #{_pearl_forward.3} parent=5 // pred_fallthru
      _
    %p508 = scmp.lt.s32.totalorder %s25, 2
    // Predicated region
    $region65: #{_pearl_forward.3} parent=5 // pred_check
      %p509 = pneg %p508
    $region66: #{_pearl_forward.3} parent=5 // pred_check_branch
      %511 = sbr.rel (%p509) target = $region68
    $region67: #{_pearl_forward.3} parent=5 // pred_region
      // Predicated region
      $region69: #{_pearl_forward.3} parent=67 // pred_check
        %p512 = pneg %p45
      $region70: #{_pearl_forward.3} parent=67 // pred_check_branch
        %514 = sbr.rel (%p512) target = $region72
      $region71: #{_pearl_forward.3} parent=67 // pred_region
        %s515 = smul.u32 2, %s25
        %p516 = scmp.lt.s32.totalorder %s515, 3
        %s517 = scalar_select %p516, %s515, 3
        %s518 = smul.addr %s517, 8
        %s519 = scalar_lea.vmem %s0, %s518
        %s520 = smul.u32 2, %s25
      $region72: #{_pearl_forward.3} parent=67 // pred_fallthru
        _
      // Predicated region
      $region73: #{_pearl_forward.3} parent=67 // pred_check
        %p521 = pneg %p71
      $region74: #{_pearl_forward.3} parent=67 // pred_check_branch
        %523 = sbr.rel (%p521) target = $region76
      $region75: #{_pearl_forward.3} parent=67 // pred_region
        %s524 = smul.u32 2, %s25
        %p525 = scmp.lt.s32.totalorder %s524, 3
        %s526 = scalar_select %p525, %s524, 3
        %s527 = smul.addr %s526, 8
        %s528 = scalar_lea.vmem %s1, %s527
        %s529 = smul.u32 2, %s25
      $region76: #{_pearl_forward.3} parent=67 // pred_fallthru
        _
      // Predicated region
      $region77: #{_pearl_forward.3} parent=67 // pred_check
        %p530 = pneg %p97
      $region78: #{_pearl_forward.3} parent=67 // pred_check_branch
        %532 = sbr.rel (%p530) target = $region80
      $region79: #{_pearl_forward.3} parent=67 // pred_region
        %s533 = smul.u32 2, %s25
        %p534 = scmp.lt.s32.totalorder %s533, 3
        %s535 = scalar_select %p534, %s533, 3
        %s536 = scalar_lea.vmem %s2, %s535
        %s537 = smul.u32 2, %s25
      $region80: #{_pearl_forward.3} parent=67 // pred_fallthru
        _
      // Predicated region
      $region81: #{_pearl_forward.3} parent=67 // pred_check
        %p538 = pneg %p123
      $region82: #{_pearl_forward.3} parent=67 // pred_check_branch
        %540 = sbr.rel (%p538) target = $region84
      $region83: #{_pearl_forward.3} parent=67 // pred_region
        %s541 = smul.u32 2, %s25
        %p542 = scmp.lt.s32.totalorder %s541, 3
        %s543 = scalar_select %p542, %s541, 3
        %s544 = smul.addr %s543, 8
        %s545 = scalar_lea.vmem %s3, %s544
        %s546 = smul.u32 2, %s25
      $region84: #{_pearl_forward.3} parent=67 // pred_fallthru
        _
    $region68: #{_pearl_forward.3} parent=5 // pred_fallthru
      _
    %p547 = scmp.le.s32.totalorder 1, %s25
    %p548 = scmp.lt.s32.totalorder %s25, 3
    %p549 = pnand %p547, %p548
    %p550 = pneg %p549
    // Predicated region
    $region85: #{_pearl_forward.3} parent=5 // pred_check
      _
    $region86: #{_pearl_forward.3} parent=5 // pred_check_branch
      %552 = sbr.rel (%p549) target = $region88
    $region87: #{_pearl_forward.3} parent=5 // pred_region
      %s553 = ssub.s32 %s25, 1
      %s554 = smul.u32 2, %s30
      %p555 = scmp.lt.s32.totalorder %s554, 3
      %s556 = scalar_select %p555, %s554, 3
      %s557 = smul.addr %s556, 8
      %s558 = scalar_lea.vmem %s0, %s557
      %p559 = pneg %p51
      %p560 = pneg %p48
      %s561 = smul.u32 2, %s30
      %p562 = scmp.lt.s32.totalorder %s561, 3
      %s563 = scalar_select %p562, %s561, 3
      %s564 = smul.addr %s563, 8
      %s565 = scalar_lea.vmem %s1, %s564
      %p566 = pneg %p77
      %p567 = pneg %p74
      %s568 = smul.u32 2, %s30
      %p569 = scmp.lt.s32.totalorder %s568, 3
      %s570 = scalar_select %p569, %s568, 3
      %s571 = scalar_lea.vmem %s2, %s570
      %p572 = pneg %p103
      %p573 = pneg %p100
      %s574 = smul.u32 2, %s30
      %p575 = scmp.lt.s32.totalorder %s574, 3
      %s576 = scalar_select %p575, %s574, 3
      %s577 = smul.addr %s576, 8
      %s578 = scalar_lea.vmem %s3, %s577
      %p579 = pneg %p129
      %p580 = pneg %p126
      %p581 = pneg %p150
      %p582 = pneg %p147
      %p583 = pneg %p171
      %p584 = pneg %p168
      %p585 = pneg %p192
      %p586 = pneg %p189
      %p587 = pneg %p213
      %p588 = pneg %p210
      %p589 = pneg %p234
      %p590 = pneg %p231
      %p591 = pneg %p255
      %p592 = pneg %p252
      %p593 = pneg %p276
      %p594 = pneg %p273
      %p595 = pneg %p297
      %p596 = pneg %p294
      %p597 = pneg %p318
      %p598 = pneg %p315
      %p599 = pneg %p339
      %p600 = pneg %p336
      %p601 = pneg %p360
      %p602 = pneg %p357
      %p603 = pneg %p381
      %p604 = pneg %p378
      %p605 = pneg %p402
      %p606 = pneg %p399
      %p607 = pneg %p428
      %p608 = pneg %p425
      %s609 = smul.u32 2, %s30
      %p610 = scmp.lt.s32.totalorder %s609, 3
      %s611 = scalar_select %p610, %s609, 3
      %s612 = scalar_lea.vmem %s17, %s611
      %p613 = pneg %p454
      %p614 = pneg %p451
      %s615 = smul.u32 2, %s30
      %p616 = scmp.lt.s32.totalorder %s615, 3
      %s617 = scalar_select %p616, %s615, 3
      %s618 = smul.addr %s617, 8
      %s619 = scalar_lea.vmem %s18, %s618
      %s620 = smul.u32 2, %s30
      %p621 = scmp.lt.s32.totalorder %s620, 3
      %s622 = scalar_select %p621, %s620, 3
      %s623 = smul.addr %s622, 8
      %s624 = scalar_lea.vmem %s0, %s623
      %s625 = smul.u32 2, %s30
      %s626 = smul.u32 2, %s30
      %p627 = scmp.lt.s32.totalorder %s626, 3
      %s628 = scalar_select %p627, %s626, 3
      %s629 = smul.addr %s628, 8
      %s630 = scalar_lea.vmem %s1, %s629
      %s631 = smul.u32 2, %s30
      %s632 = smul.u32 2, %s30
      %p633 = scmp.lt.s32.totalorder %s632, 3
      %s634 = scalar_select %p633, %s632, 3
      %s635 = scalar_lea.vmem %s2, %s634
      %s636 = smul.u32 2, %s30
      %s637 = smul.u32 2, %s30
      %p638 = scmp.lt.s32.totalorder %s637, 3
      %s639 = scalar_select %p638, %s637, 3
      %s640 = smul.addr %s639, 8
      %s641 = scalar_lea.vmem %s3, %s640
      %s642 = smul.u32 2, %s30
      %s643 = smul.u32 2, %s30
      %p644 = scmp.lt.s32.totalorder %s643, 3
      %s645 = scalar_select %p644, %s643, 3
      %s646 = scalar_lea.vmem %s17, %s645
      %s647 = smul.u32 2, %s30
      %s648 = smul.u32 2, %s30
      %p649 = scmp.lt.s32.totalorder %s648, 3
      %s650 = scalar_select %p649, %s648, 3
      %s651 = smul.addr %s650, 8
      %s652 = scalar_lea.vmem %s18, %s651
      %s653 = smul.u32 2, %s30
      %v655 = vld [vmem:[%s624] sm:$0xff]
      %v656 = vld [vmem:[%s624 + $0x8] sm:$0xff]
      %v657 = vpack.c.bf16 %v656, %v655
      %v658 = vld [vmem:[%s4] sm:$0xf]
      %v659 = vld [vmem:[%s4 + $0x4] sm:$0xf]
      %v660 = vld [vmem:[%s4 + $0x8] sm:$0x7]
      %v661 = vld [vmem:[%s5] sm:$0x1]
      %v663 = vlaneseq
      %v664 = vshrl.u32 %v663, 7
      %v665 = vsub.s32 0, %v664
      %v666 = vrot.slane %v661, %v665
      %v671 = vunpack.c.l.b16 %v658
      %v672 = vunpack.c.l.b16 %v659
      %v673 = vunpack.c.l.b16 %v660
      %v674 = vpack.c.b16 %v672, %v671
      %v675 = vpack.c.b16 %v673, %v673
      %vm677 = vcmask 171008
      %v679 = vsel %vm677, %v657, 0
      %vm681 = vcmask 1041408
      %vm682 = vcmask 1042432
      %v683 = vsel %vm681, 4294967295, 65535
      %v684 = vsel %vm682, %v683, 0
      %v686 = vand.u32 %v675, %v684
      %688 = vmatprep.subr.bf16.mxu0 0
      %689 = vmatpush1.bf16.msra.mxu0 0
      %690 = vmatprep.subr.bf16.mxu0 0
      %691 = vmatpush1.bf16.msra.mxu0 0
      %692 = vmatprep.subr.bf16.mxu0 0
      %693 = vmatpush1.bf16.msra.mxu0 0
      %694 = vmatprep.subr.bf16.mxu0 0
      %695 = vmatpush1.bf16.msra.mxu0 0
      %696 = vmatprep.subr.bf16.mxu0 0
      %697 = vmatpush1.bf16.msra.mxu0 0
      %698 = vmatprep.subr.bf16.mxu0 0
      %699 = vmatpush1.bf16.msra.mxu0 0
      %700 = vmatprep.subr.bf16.mxu0 0
      %701 = vmatpush1.bf16.msra.mxu0 %v686
      %702 = vmatprep.subr.bf16.mxu0 0
      %703 = vmatpush1.bf16.msra.mxu0 %v674
      %704 = vmatprep.subr.bf16.mxu0 0
      %705 = vmatpush2.bf16.msra.mxu0 0
      %706 = vmatprep.subr.bf16.mxu0 0
      %707 = vmatpush2.bf16.msra.mxu0 0
      %708 = vmatprep.subr.bf16.mxu0 0
      %709 = vmatpush2.bf16.msra.mxu0 0
      %710 = vmatprep.subr.bf16.mxu0 0
      %711 = vmatpush2.bf16.msra.mxu0 0
      %712 = vmatprep.subr.bf16.mxu0 0
      %713 = vmatpush2.bf16.msra.mxu0 0
      %714 = vmatprep.subr.bf16.mxu0 0
      %715 = vmatpush2.bf16.msra.mxu0 0
      %716 = vmatprep.subr.bf16.mxu0 0
      %717 = vmatpush2.bf16.msra.mxu0 0
      %718 = vmatprep.subr.bf16.mxu0 0
      %719 = vmatpush2.bf16.msra.mxu0 0
      %720 = vmatprep.mubr.bf16.mxu0 0
      %721 = vmatmul.mubr.bf16.gmra.mxu0 %v679
      %v722 = vpop.f32.mrf.mxu0
      %v723 = vadd.f32 %v666, %v722
      %v724 = vpop.f32.mrf.mxu0
      %v725 = vpop.f32.mrf.mxu0
      %v726 = vadd.f32 %v666, %v725
      %v727 = vpop.f32.mrf.mxu0
      %728 = vdwg.mxu0
      %v729 = vmax.f32 %v723, 0.0
      %v730 = vmax.f32 %v726, 0.0
      %v731 = vpack.c.bf16 %v730, %v729
      %v732 = vld [vmem:[%s6] sm:$0xf]
      %v733 = vld [vmem:[%s6 + $0x4] sm:$0xf]
      %v734 = vld [vmem:[%s6 + $0x8] sm:$0xf]
      %v735 = vld [vmem:[%s6 + $0xc] sm:$0xf]
      %v736 = vld [vmem:[%s7] sm:$0x1]
      %v738 = vlaneseq
      %v739 = vshrl.u32 %v738, 7
      %v740 = vsub.s32 0, %v739
      %v741 = vrot.slane %v736, %v740
      %v747 = vunpack.c.l.b16 %v732
      %v748 = vunpack.c.l.b16 %v733
      %v749 = vunpack.c.l.b16 %v734
      %v750 = vunpack.c.l.b16 %v735
      %v751 = vpack.c.b16 %v748, %v747
      %v752 = vpack.c.b16 %v750, %v749
      %vm755 = vcmask 261120
      %v757 = vsel %vm755, %v731, 0
      %759 = vmatprep.subr.bf16.mxu0 0
      %760 = vmatpush1.bf16.msra.mxu0 0
      %761 = vmatprep.subr.bf16.mxu0 0
      %762 = vmatpush1.bf16.msra.mxu0 0
      %763 = vmatprep.subr.bf16.mxu0 0
      %764 = vmatpush1.bf16.msra.mxu0 0
      %765 = vmatprep.subr.bf16.mxu0 0
      %766 = vmatpush1.bf16.msra.mxu0 0
      %767 = vmatprep.subr.bf16.mxu0 0
      %768 = vmatpush1.bf16.msra.mxu0 0
      %769 = vmatprep.subr.bf16.mxu0 0
      %770 = vmatpush1.bf16.msra.mxu0 0
      %771 = vmatprep.subr.bf16.mxu0 0
      %772 = vmatpush1.bf16.msra.mxu0 %v752
      %773 = vmatprep.subr.bf16.mxu0 0
      %774 = vmatpush1.bf16.msra.mxu0 %v751
      %775 = vmatprep.subr.bf16.mxu0 0
      %776 = vmatpush2.bf16.msra.mxu0 0
      %777 = vmatprep.subr.bf16.mxu0 0
      %778 = vmatpush2.bf16.msra.mxu0 0
      %779 = vmatprep.subr.bf16.mxu0 0
      %780 = vmatpush2.bf16.msra.mxu0 0
      %781 = vmatprep.subr.bf16.mxu0 0
      %782 = vmatpush2.bf16.msra.mxu0 0
      %783 = vmatprep.subr.bf16.mxu0 0
      %784 = vmatpush2.bf16.msra.mxu0 0
      %785 = vmatprep.subr.bf16.mxu0 0
      %786 = vmatpush2.bf16.msra.mxu0 0
      %787 = vmatprep.subr.bf16.mxu0 0
      %788 = vmatpush2.bf16.msra.mxu0 0
      %789 = vmatprep.subr.bf16.mxu0 0
      %790 = vmatpush2.bf16.msra.mxu0 0
      %791 = vmatprep.mubr.bf16.mxu0 0
      %792 = vmatmul.mubr.bf16.gmra.mxu0 %v757
      %v793 = vpop.f32.mrf.mxu0
      %v794 = vadd.f32 %v741, %v793
      %v795 = vpop.f32.mrf.mxu0
      %v796 = vpop.f32.mrf.mxu0
      %v797 = vadd.f32 %v741, %v796
      %v798 = vpop.f32.mrf.mxu0
      %799 = vdwg.mxu0
      %v800 = vmax.f32 %v794, 0.0
      %v801 = vmax.f32 %v797, 0.0
      %v802 = vpack.c.bf16 %v801, %v800
      %v803 = vld [vmem:[%s8] sm:$0xf]
      %v804 = vld [vmem:[%s8 + $0x4] sm:$0xf]
      %v805 = vld [vmem:[%s8 + $0x8] sm:$0xf]
      %v806 = vld [vmem:[%s8 + $0xc] sm:$0xf]
      %v807 = vld [vmem:[%s9] sm:$0x1]
      %v809 = vlaneseq
      %v810 = vshrl.u32 %v809, 7
      %v811 = vsub.s32 0, %v810
      %v812 = vrot.slane %v807, %v811
      %v818 = vunpack.c.l.b16 %v803
      %v819 = vunpack.c.l.b16 %v804
      %v820 = vunpack.c.l.b16 %v805
      %v821 = vunpack.c.l.b16 %v806
      %v822 = vpack.c.b16 %v819, %v818
      %v823 = vpack.c.b16 %v821, %v820
      %v827 = vsel %vm755, %v802, 0
      %829 = vmatprep.subr.bf16.mxu0 0
      %830 = vmatpush1.bf16.msra.mxu0 0
      %831 = vmatprep.subr.bf16.mxu0 0
      %832 = vmatpush1.bf16.msra.mxu0 0
      %833 = vmatprep.subr.bf16.mxu0 0
      %834 = vmatpush1.bf16.msra.mxu0 0
      %835 = vmatprep.subr.bf16.mxu0 0
      %836 = vmatpush1.bf16.msra.mxu0 0
      %837 = vmatprep.subr.bf16.mxu0 0
      %838 = vmatpush1.bf16.msra.mxu0 0
      %839 = vmatprep.subr.bf16.mxu0 0
      %840 = vmatpush1.bf16.msra.mxu0 0
      %841 = vmatprep.subr.bf16.mxu0 0
      %842 = vmatpush1.bf16.msra.mxu0 %v823
      %843 = vmatprep.subr.bf16.mxu0 0
      %844 = vmatpush1.bf16.msra.mxu0 %v822
      %845 = vmatprep.subr.bf16.mxu0 0
      %846 = vmatpush2.bf16.msra.mxu0 0
      %847 = vmatprep.subr.bf16.mxu0 0
      %848 = vmatpush2.bf16.msra.mxu0 0
      %849 = vmatprep.subr.bf16.mxu0 0
      %850 = vmatpush2.bf16.msra.mxu0 0
      %851 = vmatprep.subr.bf16.mxu0 0
      %852 = vmatpush2.bf16.msra.mxu0 0
      %853 = vmatprep.subr.bf16.mxu0 0
      %854 = vmatpush2.bf16.msra.mxu0 0
      %855 = vmatprep.subr.bf16.mxu0 0
      %856 = vmatpush2.bf16.msra.mxu0 0
      %857 = vmatprep.subr.bf16.mxu0 0
      %858 = vmatpush2.bf16.msra.mxu0 0
      %859 = vmatprep.subr.bf16.mxu0 0
      %860 = vmatpush2.bf16.msra.mxu0 0
      %861 = vmatprep.mubr.bf16.mxu0 0
      %862 = vmatmul.mubr.bf16.gmra.mxu0 %v827
      %v863 = vpop.f32.mrf.mxu0
      %v864 = vadd.f32 %v812, %v863
      %v865 = vpop.f32.mrf.mxu0
      %v866 = vpop.f32.mrf.mxu0
      %v867 = vadd.f32 %v812, %v866
      %v868 = vpop.f32.mrf.mxu0
      %869 = vdwg.mxu0
      %v870 = vmax.f32 %v864, 0.0
      %v871 = vmax.f32 %v867, 0.0
      %vm872 = vcmp.ne.f32.partialorder %v864, %v864
      %vm873 = vcmp.ne.f32.partialorder %v867, %v867
      %v874 = vadd.f32 %v864, 0.0
      %v875 = vadd.f32 %v867, 0.0
      %v876 = vand.u32 2147483647, %v864
      %v877 = vand.u32 2147483647, %v867
      %v878 = vsub.f32 0.0, %v876
      %v879 = vsub.f32 0.0, %v877
      %v880 = vmul.f32 %v878, 1.442695
      %v881 = vpow.pop %v880
      %v882 = vmul.f32 %v879, 1.442695
      %v883 = vpow.pop %v882
      %v884 = vadd.f32 %v881, 1.0
      %v885 = vlog2.pop %v884
      %v886 = vmul.f32 %v885, 0.6931472
      %v887 = vmul.f32 -0.5, %v881
      %v888 = vadd.f32 %v887, 1.0
      %v889 = vmul.f32 %v888, %v881
      %v890 = vand.u32 2147483647, %v881
      %vm891 = vcmp.lt.f32.partialorder %v890, 0.0004427343
      %v892 = vsel %vm891, %v889, %v886
      %v893 = vadd.f32 %v883, 1.0
      %v894 = vlog2.pop %v893
      %v895 = vmul.f32 %v894, 0.6931472
      %v896 = vmul.f32 -0.5, %v883
      %v897 = vadd.f32 %v896, 1.0
      %v898 = vmul.f32 %v897, %v883
      %v899 = vand.u32 2147483647, %v883
      %vm900 = vcmp.lt.f32.partialorder %v899, 0.0004427343
      %v901 = vsel %vm900, %v898, %v895
      %v902 = vadd.f32 %v870, %v892
      %v903 = vadd.f32 %v871, %v901
      %v904 = vsel %vm872, %v874, %v902
      %v905 = vsel %vm873, %v875, %v903
      %v906 = vmax.f32 %v904, 1e-07
      %v907 = vmax.f32 %v905, 1e-07
      %v908 = vrcp.pop %v906
      %v909 = vmul.f32 1.0, %v908
      %v910 = vrcp.pop %v907
      %v911 = vmul.f32 1.0, %v910
      %vm912 = vcmask 130112
      %v913 = vsel %vm912, %v909, 0.0
      %v914 = vrot.slane %v913, 4
      %v915 = vadd.f32 %v913, %v914
      %v916 = vrot.slane %v915, 2
      %v917 = vadd.f32 %v915, %v916
      %v918 = vrot.slane %v917, 1
      %v919 = vadd.f32 %v917, %v918
      %v920 = vsel %vm912, %v911, 0.0
      %v921 = vrot.slane %v920, 4
      %v922 = vadd.f32 %v920, %v921
      %v923 = vrot.slane %v922, 2
      %v924 = vadd.f32 %v922, %v923
      %v925 = vrot.slane %v924, 1
      %v926 = vadd.f32 %v924, %v925
      %v927 = vrcp.pop %v919
      %v928 = vmul.f32 1.0, %v927
      %v929 = vrcp.pop %v926
      %v930 = vmul.f32 1.0, %v929
      %933 = vrot.lane.b32.xlu0 %v909, 120
      %v934 = vpop.permute.xlu0 %933
      %935 = vrot.lane.b32.xlu0 %v911, 120
      %v936 = vpop.permute.xlu0 %935
      %v939 = vmul.f32 %v864, %v934
      %v940 = vmul.f32 %v867, %v936
      %vm941 = vcmask 64512
      %v942 = vsel %vm941, %v939, 0.0
      %v943 = vrot.slane %v942, 4
      %v944 = vadd.f32 %v942, %v943
      %v945 = vrot.slane %v944, 2
      %v946 = vadd.f32 %v944, %v945
      %v947 = vrot.slane %v946, 1
      %v948 = vadd.f32 %v946, %v947
      %v949 = vsel %vm941, %v940, 0.0
      %v950 = vrot.slane %v949, 4
      %v951 = vadd.f32 %v949, %v950
      %v952 = vrot.slane %v951, 2
      %v953 = vadd.f32 %v951, %v952
      %v954 = vrot.slane %v953, 1
      %v955 = vadd.f32 %v953, %v954
      %958 = vrot.lane.b32.xlu0 %v948, 8
      %v959 = vpop.permute.xlu0 %958
      %960 = vrot.lane.b32.xlu0 %v955, 8
      %v961 = vpop.permute.xlu0 %960
      %v964 = vmul.f32 %v928, %v959
      %v965 = vmul.f32 %v930, %v961
      %v966 = vrsqrt.pop %v928
      %v967 = vmul.f32 %v928, %v966
      %vm968 = vcmp.eq.f32.partialorder %v928, inf
      %v969 = vsel %vm968, %v928, %v967
      %vm970 = vcmp.eq.f32.partialorder %v928, 0.0
      %v971 = vand.u32 %v928, 2147483648
      %v972 = vsel %vm970, %v971, %v969
      %v973 = vrsqrt.pop %v930
      %v974 = vmul.f32 %v930, %v973
      %vm975 = vcmp.eq.f32.partialorder %v930, inf
      %v976 = vsel %vm975, %v930, %v974
      %vm977 = vcmp.eq.f32.partialorder %v930, 0.0
      %v978 = vand.u32 %v930, 2147483648
      %v979 = vsel %vm977, %v978, %v976
      %v980 = vld [vmem:[%s635] sm:$0x1]
      %v981 = vld [vmem:[%s635 + $0x1] sm:$0x1]
      %v984 = vlaneseq
      %v985 = vshrl.u32 %v984, 7
      %v986 = vsub.s32 0, %v985
      %v987 = vrot.slane %v980, %v986
      %v988 = vlaneseq
      %v989 = vshrl.u32 %v988, 7
      %v990 = vsub.s32 0, %v989
      %v991 = vrot.slane %v981, %v990
      %992 = vrot.lane.b32.xlu0 %v987, 8
      %v993 = vpop.permute.xlu0 %992
      %994 = vrot.lane.b32.xlu0 %v991, 8
      %v995 = vpop.permute.xlu0 %994
      %v998 = vmul.f32 %v972, %v993
      %v999 = vmul.f32 %v979, %v995
      %v1000 = vadd.f32 %v964, %v998
      %v1001 = vadd.f32 %v965, %v999
      %v1004 = vrot.slane %v965, 7
      %vm1005 = vcmask 1041409
      %v1006 = vsel %vm1005, %v1004, %v964
      %1007 = vrot.lane.b32.xlu0 %v1006, 120
      %v1008 = vpop.permute.xlu0 %1007
      %v1012 = vsel %vm1005, %v930, %v928
      %v1016 = vrot.slane %v1001, 7
      %v1017 = vsel %vm1005, %v1016, %v1000
      %1018 = vrot.lane.b32.xlu0 %v1017, 8
      %v1019 = vpop.permute.xlu0 %1018
      %v1021 = vsel %vm941, %v1008, %v1012
      %vm1022 = vcmask 130048
      %v1023 = vsel %vm1022, %v1021, %v1019
      %vm1024 = vcmask 195584
      %v1025 = vsel %vm1024, %v1023, 0.0
      %v1028 = vunpack.c.l.s4 1966171168
      %v1029 = vunpack.c.0.s8 %v1028
      %v1030 = vlaneseq
      %v1031 = vshrl.u32 %v1030, 7
      %v1032 = vsub.s32 %v1029, %v1031
      %v1033 = vrot.slane %v1025, %v1032
      %v1034 = vcombine.high %v1033, %v1033
      %v1036 = vunpack.c.l.s4 1966171168
      %v1037 = vunpack.c.0.s8 %v1036
      %v1038 = vlaneseq
      %v1039 = vshrl.u32 %v1038, 7
      %v1040 = vsub.s32 %v1037, %v1039
      %v1041 = vrot.slane %v1033, %v1040
      %v1043 = vunpack.c.l.s4 1966171168
      %v1044 = vunpack.c.0.s8 %v1043
      %v1045 = vlaneseq
      %v1046 = vshrl.u32 %v1045, 7
      %v1047 = vsub.s32 %v1044, %v1046
      %v1048 = vrot.slane %v1034, %v1047
      %1051 = vst [vmem:[%s646] sm:$0x1] %v1041
      %1052 = vst [vmem:[%s646 + $0x1] sm:$0x1] %v1048
      %v1053 = vld [vmem:[%s630] sm:$0xff]
      %v1054 = vld [vmem:[%s630 + $0x8] sm:$0xff]
      %v1055 = vpack.c.bf16 %v1054, %v1053
      %v1056 = vld [vmem:[%s10] sm:$0xf]
      %v1057 = vld [vmem:[%s10 + $0x4] sm:$0xf]
      %v1060 = vunpack.c.l.b16 %v1056
      %v1061 = vunpack.c.l.b16 %v1057
      %v1062 = vpack.c.b16 %v1061, %v1060
      %v1065 = vsel %vm1022, %v1055, 0
      %1067 = vmatprep.subr.bf16.mxu0 0
      %1068 = vmatpush1.bf16.msra.mxu0 0
      %1069 = vmatprep.subr.bf16.mxu0 0
      %1070 = vmatpush1.bf16.msra.mxu0 0
      %1071 = vmatprep.subr.bf16.mxu0 0
      %1072 = vmatpush1.bf16.msra.mxu0 0
      %1073 = vmatprep.subr.bf16.mxu0 0
      %1074 = vmatpush1.bf16.msra.mxu0 0
      %1075 = vmatprep.subr.bf16.mxu0 0
      %1076 = vmatpush1.bf16.msra.mxu0 0
      %1077 = vmatprep.subr.bf16.mxu0 0
      %1078 = vmatpush1.bf16.msra.mxu0 0
      %1079 = vmatprep.subr.bf16.mxu0 0
      %1080 = vmatpush1.bf16.msra.mxu0 0
      %1081 = vmatprep.subr.bf16.mxu0 0
      %1082 = vmatpush1.bf16.msra.mxu0 %v1062
      %1083 = vmatprep.subr.bf16.mxu0 0
      %1084 = vmatpush2.bf16.msra.mxu0 0
      %1085 = vmatprep.subr.bf16.mxu0 0
      %1086 = vmatpush2.bf16.msra.mxu0 0
      %1087 = vmatprep.subr.bf16.mxu0 0
      %1088 = vmatpush2.bf16.msra.mxu0 0
      %1089 = vmatprep.subr.bf16.mxu0 0
      %1090 = vmatpush2.bf16.msra.mxu0 0
      %1091 = vmatprep.subr.bf16.mxu0 0
      %1092 = vmatpush2.bf16.msra.mxu0 0
      %1093 = vmatprep.subr.bf16.mxu0 0
      %1094 = vmatpush2.bf16.msra.mxu0 0
      %1095 = vmatprep.subr.bf16.mxu0 0
      %1096 = vmatpush2.bf16.msra.mxu0 0
      %1097 = vmatprep.subr.bf16.mxu0 0
      %1098 = vmatpush2.bf16.msra.mxu0 0
      %1099 = vmatprep.mubr.bf16.mxu0 0
      %1100 = vmatmul.mubr.bf16.gmra.mxu0 %v1065
      %v1101 = vpop.f32.mrf.mxu0
      %v1102 = vadd.f32 0.0, %v1101
      %v1103 = vpop.f32.mrf.mxu0
      %v1104 = vpop.f32.mrf.mxu0
      %v1105 = vadd.f32 0.0, %v1104
      %v1106 = vpop.f32.mrf.mxu0
      %1107 = vdwg.mxu0
      %v1108 = vpack.c.bf16 %v1000, %v1000
      %v1109 = vpack.c.bf16 %v1001, %v1001
      %v1110 = vld [vmem:[%s11] sm:$0xf]
      %v1113 = vunpack.c.l.b16 %v1108
      %v1114 = vunpack.c.l.b16 %v1109
      %v1115 = vrot.slane %v1114, 7
      %v1116 = vsel %vm1005, %v1115, %v1113
      %v1117 = vpack.c.b16 %v1116, %v1116
      %1118 = vrot.lane.b32.xlu0 %v1117, 120
      %v1119 = vpop.permute.xlu0 %1118
      %v1121 = vsel %vm941, %v1119, 0
      %vm1123 = vcmask 1043456
      %v1125 = vsel %vm1123, %v1110, 0
      %1127 = vmatprep.subr.bf16.mxu0 0
      %1128 = vmatpush1.bf16.msra.mxu0 0
      %1129 = vmatprep.subr.bf16.mxu0 0
      %1130 = vmatpush1.bf16.msra.mxu0 0
      %1131 = vmatprep.subr.bf16.mxu0 0
      %1132 = vmatpush1.bf16.msra.mxu0 0
      %1133 = vmatprep.subr.bf16.mxu0 0
      %1134 = vmatpush1.bf16.msra.mxu0 0
      %1135 = vmatprep.subr.bf16.mxu0 0
      %1136 = vmatpush1.bf16.msra.mxu0 0
      %1137 = vmatprep.subr.bf16.mxu0 0
      %1138 = vmatpush1.bf16.msra.mxu0 0
      %1139 = vmatprep.subr.bf16.mxu0 0
      %1140 = vmatpush1.bf16.msra.mxu0 0
      %1141 = vmatprep.subr.bf16.mxu0 0
      %1142 = vmatpush1.bf16.msra.mxu0 %v1125
      %1143 = vmatprep.subr.bf16.mxu0 0
      %1144 = vmatpush2.bf16.msra.mxu0 0
      %1145 = vmatprep.subr.bf16.mxu0 0
      %1146 = vmatpush2.bf16.msra.mxu0 0
      %1147 = vmatprep.subr.bf16.mxu0 0
      %1148 = vmatpush2.bf16.msra.mxu0 0
      %1149 = vmatprep.subr.bf16.mxu0 0
      %1150 = vmatpush2.bf16.msra.mxu0 0
      %1151 = vmatprep.subr.bf16.mxu0 0
      %1152 = vmatpush2.bf16.msra.mxu0 0
      %1153 = vmatprep.subr.bf16.mxu0 0
      %1154 = vmatpush2.bf16.msra.mxu0 0
      %1155 = vmatprep.subr.bf16.mxu0 0
      %1156 = vmatpush2.bf16.msra.mxu0 0
      %1157 = vmatprep.subr.bf16.mxu0 0
      %1158 = vmatpush2.bf16.msra.mxu0 0
      %1159 = vmatprep.mubr.bf16.mxu0 0
      %1160 = vmatmul.mubr.bf16.gmra.mxu0 %v1121
      %v1161 = vpop.f32.mrf.mxu0
      %v1162 = vadd.f32 0.0, %v1161
      %v1163 = vpop.f32.mrf.mxu0
      %v1164 = vpop.f32.mrf.mxu0
      %v1165 = vpop.f32.mrf.mxu0
      %1166 = vdwg.mxu0
      %v1169 = vunpack.c.l.s4 1966171168
      %v1170 = vunpack.c.0.s8 %v1169
      %v1171 = vlaneseq
      %v1172 = vshrl.u32 %v1171, 7
      %v1173 = vsub.s32 %v1170, %v1172
      %v1174 = vrot.slane %v1162, %v1173
      %v1175 = vcombine.high %v1174, %v1174
      %v1177 = vunpack.c.l.s4 1966171168
      %v1178 = vunpack.c.0.s8 %v1177
      %v1179 = vlaneseq
      %v1180 = vshrl.u32 %v1179, 7
      %v1181 = vsub.s32 %v1178, %v1180
      %v1182 = vrot.slane %v1174, %v1181
      %v1184 = vunpack.c.l.s4 1966171168
      %v1185 = vunpack.c.0.s8 %v1184
      %v1186 = vlaneseq
      %v1187 = vshrl.u32 %v1186, 7
      %v1188 = vsub.s32 %v1185, %v1187
      %v1189 = vrot.slane %v1175, %v1188
      %v1190 = vlaneseq
      %v1191 = vshrl.u32 %v1190, 7
      %v1192 = vsub.s32 0, %v1191
      %v1193 = vrot.slane %v1182, %v1192
      %v1194 = vlaneseq
      %v1195 = vshrl.u32 %v1194, 7
      %v1196 = vsub.s32 0, %v1195
      %v1197 = vrot.slane %v1189, %v1196
      %v1200 = vadd.f32 %v1102, %v1193
      %v1201 = vadd.f32 %v1105, %v1197
      %v1202 = vld [vmem:[%s12] sm:$0x1]
      %v1204 = vlaneseq
      %v1205 = vshrl.u32 %v1204, 7
      %v1206 = vsub.s32 0, %v1205
      %v1207 = vrot.slane %v1202, %v1206
      %v1209 = vadd.f32 %v1200, %v1207
      %v1210 = vadd.f32 %v1201, %v1207
      %v1211 = vmax.f32 %v1209, 0.0
      %v1212 = vmax.f32 %v1210, 0.0
      %v1213 = vpack.c.bf16 %v1212, %v1211
      %v1214 = vld [vmem:[%s13] sm:$0xf]
      %v1215 = vld [vmem:[%s13 + $0x4] sm:$0xf]
      %v1216 = vld [vmem:[%s13 + $0x8] sm:$0xf]
      %v1217 = vld [vmem:[%s13 + $0xc] sm:$0xf]
      %v1218 = vld [vmem:[%s14] sm:$0x1]
      %v1220 = vlaneseq
      %v1221 = vshrl.u32 %v1220, 7
      %v1222 = vsub.s32 0, %v1221
      %v1223 = vrot.slane %v1218, %v1222
      %v1229 = vunpack.c.l.b16 %v1214
      %v1230 = vunpack.c.l.b16 %v1215
      %v1231 = vunpack.c.l.b16 %v1216
      %v1232 = vunpack.c.l.b16 %v1217
      %v1233 = vpack.c.b16 %v1230, %v1229
      %v1234 = vpack.c.b16 %v1232, %v1231
      %v1238 = vsel %vm755, %v1213, 0
      %1240 = vmatprep.subr.bf16.mxu0 0
      %1241 = vmatpush1.bf16.msra.mxu0 0
      %1242 = vmatprep.subr.bf16.mxu0 0
      %1243 = vmatpush1.bf16.msra.mxu0 0
      %1244 = vmatprep.subr.bf16.mxu0 0
      %1245 = vmatpush1.bf16.msra.mxu0 0
      %1246 = vmatprep.subr.bf16.mxu0 0
      %1247 = vmatpush1.bf16.msra.mxu0 0
      %1248 = vmatprep.subr.bf16.mxu0 0
      %1249 = vmatpush1.bf16.msra.mxu0 0
      %1250 = vmatprep.subr.bf16.mxu0 0
      %1251 = vmatpush1.bf16.msra.mxu0 0
      %1252 = vmatprep.subr.bf16.mxu0 0
      %1253 = vmatpush1.bf16.msra.mxu0 %v1234
      %1254 = vmatprep.subr.bf16.mxu0 0
      %1255 = vmatpush1.bf16.msra.mxu0 %v1233
      %1256 = vmatprep.subr.bf16.mxu0 0
      %1257 = vmatpush2.bf16.msra.mxu0 0
      %1258 = vmatprep.subr.bf16.mxu0 0
      %1259 = vmatpush2.bf16.msra.mxu0 0
      %1260 = vmatprep.subr.bf16.mxu0 0
      %1261 = vmatpush2.bf16.msra.mxu0 0
      %1262 = vmatprep.subr.bf16.mxu0 0
      %1263 = vmatpush2.bf16.msra.mxu0 0
      %1264 = vmatprep.subr.bf16.mxu0 0
      %1265 = vmatpush2.bf16.msra.mxu0 0
      %1266 = vmatprep.subr.bf16.mxu0 0
      %1267 = vmatpush2.bf16.msra.mxu0 0
      %1268 = vmatprep.subr.bf16.mxu0 0
      %1269 = vmatpush2.bf16.msra.mxu0 0
      %1270 = vmatprep.subr.bf16.mxu0 0
      %1271 = vmatpush2.bf16.msra.mxu0 0
      %1272 = vmatprep.mubr.bf16.mxu0 0
      %1273 = vmatmul.mubr.bf16.gmra.mxu0 %v1238
      %v1274 = vpop.f32.mrf.mxu0
      %v1275 = vadd.f32 %v1223, %v1274
      %v1276 = vpop.f32.mrf.mxu0
      %v1277 = vpop.f32.mrf.mxu0
      %v1278 = vadd.f32 %v1223, %v1277
      %v1279 = vpop.f32.mrf.mxu0
      %1280 = vdwg.mxu0
      %v1281 = vmax.f32 %v1275, 0.0
      %v1282 = vmax.f32 %v1278, 0.0
      %v1283 = vpack.c.bf16 %v1282, %v1281
      %v1284 = vld [vmem:[%s15] sm:$0xf]
      %v1285 = vld [vmem:[%s15 + $0x4] sm:$0xf]
      %v1286 = vld [vmem:[%s15 + $0x8] sm:$0xf]
      %v1287 = vld [vmem:[%s15 + $0xc] sm:$0xf]
      %v1288 = vld [vmem:[%s16] sm:$0x1]
      %v1290 = vlaneseq
      %v1291 = vshrl.u32 %v1290, 7
      %v1292 = vsub.s32 0, %v1291
      %v1293 = vrot.slane %v1288, %v1292
      %v1299 = vunpack.c.l.b16 %v1284
      %v1300 = vunpack.c.l.b16 %v1285
      %v1301 = vunpack.c.l.b16 %v1286
      %v1302 = vunpack.c.l.b16 %v1287
      %v1303 = vpack.c.b16 %v1300, %v1299
      %v1304 = vpack.c.b16 %v1302, %v1301
      %v1308 = vsel %vm755, %v1283, 0
      %1310 = vmatprep.subr.bf16.mxu0 0
      %1311 = vmatpush1.bf16.msra.mxu0 0
      %1312 = vmatprep.subr.bf16.mxu0 0
      %1313 = vmatpush1.bf16.msra.mxu0 0
      %1314 = vmatprep.subr.bf16.mxu0 0
      %1315 = vmatpush1.bf16.msra.mxu0 0
      %1316 = vmatprep.subr.bf16.mxu0 0
      %1317 = vmatpush1.bf16.msra.mxu0 0
      %1318 = vmatprep.subr.bf16.mxu0 0
      %1319 = vmatpush1.bf16.msra.mxu0 0
      %1320 = vmatprep.subr.bf16.mxu0 0
      %1321 = vmatpush1.bf16.msra.mxu0 0
      %1322 = vmatprep.subr.bf16.mxu0 0
      %1323 = vmatpush1.bf16.msra.mxu0 %v1304
      %1324 = vmatprep.subr.bf16.mxu0 0
      %1325 = vmatpush1.bf16.msra.mxu0 %v1303
      %1326 = vmatprep.subr.bf16.mxu0 0
      %1327 = vmatpush2.bf16.msra.mxu0 0
      %1328 = vmatprep.subr.bf16.mxu0 0
      %1329 = vmatpush2.bf16.msra.mxu0 0
      %1330 = vmatprep.subr.bf16.mxu0 0
      %1331 = vmatpush2.bf16.msra.mxu0 0
      %1332 = vmatprep.subr.bf16.mxu0 0
      %1333 = vmatpush2.bf16.msra.mxu0 0
      %1334 = vmatprep.subr.bf16.mxu0 0
      %1335 = vmatpush2.bf16.msra.mxu0 0
      %1336 = vmatprep.subr.bf16.mxu0 0
      %1337 = vmatpush2.bf16.msra.mxu0 0
      %1338 = vmatprep.subr.bf16.mxu0 0
      %1339 = vmatpush2.bf16.msra.mxu0 0
      %1340 = vmatprep.subr.bf16.mxu0 0
      %1341 = vmatpush2.bf16.msra.mxu0 0
      %1342 = vmatprep.mubr.bf16.mxu0 0
      %1343 = vmatmul.mubr.bf16.gmra.mxu0 %v1308
      %v1344 = vpop.f32.mrf.mxu0
      %v1345 = vadd.f32 %v1293, %v1344
      %v1346 = vpop.f32.mrf.mxu0
      %v1347 = vpop.f32.mrf.mxu0
      %v1348 = vadd.f32 %v1293, %v1347
      %v1349 = vpop.f32.mrf.mxu0
      %1350 = vdwg.mxu0
      %v1351 = vlaneseq
      %v1352 = vand.u32 %v1351, 127
      %vm1353 = vcmp.ge.s32.totalorder %v1352, 4
      %v1354 = vmax.f32 %v1345, -20.0
      %v1355 = vmax.f32 %v1348, -20.0
      %v1356 = vmin.f32 %v1354, 2.0
      %v1357 = vmin.f32 %v1355, 2.0
      %v1358 = vsel %vm1353, %v1356, %v1345
      %v1359 = vsel %vm1353, %v1357, %v1348
      %v1360 = vmul.f32 %v1358, 1.442695
      %v1361 = vpow.pop %v1360
      %v1362 = vmul.f32 %v1359, 1.442695
      %v1363 = vpow.pop %v1362
      %v1364 = vld [vmem:[%s641] sm:$0xff]
      %v1365 = vld [vmem:[%s641 + $0x8] sm:$0xff]
      %1368 = vrot.lane.b32.xlu0 %v1364, 4
      %v1369 = vpop.permute.xlu0 %1368
      %1370 = vrot.lane.b32.xlu0 %v1365, 4
      %v1371 = vpop.permute.xlu0 %1370
      %v1374 = vmul.f32 %v1361, %v1369
      %v1375 = vmul.f32 %v1363, %v1371
      %1378 = vrot.lane.b32.xlu0 %v1374, 124
      %v1379 = vpop.permute.xlu0 %1378
      %1380 = vrot.lane.b32.xlu0 %v1375, 124
      %v1381 = vpop.permute.xlu0 %1380
      %v1384 = vadd.f32 %v1358, %v1379
      %v1385 = vadd.f32 %v1359, %v1381
      %v1386 = vtanh.pop %v1384
      %v1387 = vtanh.pop %v1385
      %v1388 = vmul.f32 %v1364, %v1364
      %v1389 = vmul.f32 %v1365, %v1365
      %v1390 = vmul.f32 %v1388, -0.5
      %v1391 = vmul.f32 %v1389, -0.5
      %1394 = vrot.lane.b32.xlu0 %v1358, 124
      %v1395 = vpop.permute.xlu0 %1394
      %1396 = vrot.lane.b32.xlu0 %v1359, 124
      %v1397 = vpop.permute.xlu0 %1396
      %v1400 = vsub.f32 %v1390, %v1395
      %v1401 = vsub.f32 %v1391, %v1397
      %v1402 = vsub.f32 %v1400, 0.9189385
      %v1403 = vsub.f32 %v1401, 0.9189385
      %v1404 = vmul.f32 %v1386, %v1386
      %v1405 = vmul.f32 %v1387, %v1387
      %v1406 = vsub.f32 1.0, %v1404
      %v1407 = vsub.f32 1.0, %v1405
      %v1408 = vadd.f32 %v1406, 1e-06
      %v1409 = vadd.f32 %v1407, 1e-06
      %v1410 = vlog2.pop %v1408
      %v1411 = vmul.f32 %v1410, 0.6931472
      %v1412 = vlog2.pop %v1409
      %v1413 = vmul.f32 %v1412, 0.6931472
      %v1414 = vsub.f32 %v1402, %v1411
      %v1415 = vsub.f32 %v1403, %v1413
      %vm1416 = vcmask 31744
      %v1417 = vsel %vm1416, %v1414, 0.0
      %1418 = vadd.xlane.f32.xlu0 %v1417
      %v1419 = vpop.xlane.xlu0 %1418
      %v1420 = vsel %vm1416, %v1415, 0.0
      %1421 = vadd.xlane.f32.xlu0 %v1420
      %v1422 = vpop.xlane.xlu0 %1421
      %1425 = vrot.lane.b32.xlu0 %v1386, 8
      %v1426 = vpop.permute.xlu0 %1425
      %1427 = vrot.lane.b32.xlu0 %v1387, 8
      %v1428 = vpop.permute.xlu0 %1427
      %1433 = vrot.lane.b32.xlu0 %v1384, 12
      %v1434 = vpop.permute.xlu0 %1433
      %1435 = vrot.lane.b32.xlu0 %v1385, 12
      %v1436 = vpop.permute.xlu0 %1435
      %v1439 = vsel %vm941, %v1358, %v1426
      %v1440 = vsel %vm941, %v1359, %v1428
      %vm1441 = vcmask 97280
      %v1442 = vsel %vm1441, %v1439, %v1434
      %v1443 = vsel %vm1441, %v1440, %v1436
      %v1444 = vsel %vm1022, %v1442, %v1419
      %v1445 = vsel %vm1022, %v1443, %v1422
      %vm1446 = vcmask 138240
      %v1447 = vsel %vm1446, %v1444, 0.0
      %v1448 = vsel %vm1446, %v1445, 0.0
      %1449 = vst [vmem:[%s652] sm:$0xff] %v1447
      %1450 = vst [vmem:[%s652 + $0x8] sm:$0xff] %v1448
      %s1451 = smul.u32 2, %s30
      %p1452 = scmp.lt.s32.totalorder %s1451, 3
      %s1453 = scalar_select %p1452, %s1451, 3
      %s1454 = scalar_lea.vmem %s17, %s1453
      %s1455 = smul.u32 2, %s30
      %p1456 = scmp.lt.s32.totalorder %s1455, 3
      %s1457 = scalar_select %p1456, %s1455, 3
      %s1458 = smul.addr %s1457, 8
      %s1459 = scalar_lea.vmem %s18, %s1458
      // Predicated region
      $region89: #{_pearl_forward.3} parent=87 // pred_check
        %p1460 = pneg %p425
      $region90: #{_pearl_forward.3} parent=87 // pred_check_branch
        %1462 = sbr.rel (%p1460) target = $region92
      $region91: #{_pearl_forward.3} parent=87 // pred_region
        %s1463 = smul.u32 2, %s30
      $region92: #{_pearl_forward.3} parent=87 // pred_fallthru
        _
      // Predicated region
      $region93: #{_pearl_forward.3} parent=87 // pred_check
        %p1464 = pneg %p451
      $region94: #{_pearl_forward.3} parent=87 // pred_check_branch
        %1466 = sbr.rel (%p1464) target = $region96
      $region95: #{_pearl_forward.3} parent=87 // pred_region
        %s1467 = smul.u32 2, %s30
      $region96: #{_pearl_forward.3} parent=87 // pred_fallthru
        _
    $region88: #{_pearl_forward.3} parent=5 // pred_fallthru
      _
    %p1468 = scmp.le.s32.totalorder 2, %s25
    // Predicated region
    $region97: #{_pearl_forward.3} parent=5 // pred_check
      %p1469 = pneg %p1468
    $region98: #{_pearl_forward.3} parent=5 // pred_check_branch
      %1471 = sbr.rel (%p1469) target = $region100
    $region99: #{_pearl_forward.3} parent=5 // pred_region
      %s1472 = ssub.s32 %s25, 2
      // Predicated region
      $region101: #{_pearl_forward.3} parent=99 // pred_check
        %p1473 = pneg %p431
      $region102: #{_pearl_forward.3} parent=99 // pred_check_branch
        %1475 = sbr.rel (%p1473) target = $region104
      $region103: #{_pearl_forward.3} parent=99 // pred_region
        %s1476 = smul.u32 2, %s31
        %p1477 = scmp.lt.s32.totalorder %s1476, 3
        %s1478 = scalar_select %p1477, %s1476, 3
        %s1479 = scalar_lea.vmem %s17, %s1478
      $region104: #{_pearl_forward.3} parent=99 // pred_fallthru
        _
      // Predicated region
      $region105: #{_pearl_forward.3} parent=99 // pred_check
        %p1480 = pneg %p457
      $region106: #{_pearl_forward.3} parent=99 // pred_check_branch
        %1482 = sbr.rel (%p1480) target = $region108
      $region107: #{_pearl_forward.3} parent=99 // pred_region
        %s1483 = smul.u32 2, %s31
        %p1484 = scmp.lt.s32.totalorder %s1483, 3
        %s1485 = scalar_select %p1484, %s1483, 3
        %s1486 = smul.addr %s1485, 8
        %s1487 = scalar_lea.vmem %s18, %s1486
      $region108: #{_pearl_forward.3} parent=99 // pred_fallthru
        _
    $region100: #{_pearl_forward.3} parent=5 // pred_fallthru
      _
  $region6: #{_pearl_forward.3} parent=0 // loop_footer
    %s29 = sadd.s32 1, %s25
  $region7: #{_pearl_forward.3} parent=0 // loop_footer_branch
    %24 = sbr.rel target = $region3
  $region8: #{_pearl_forward.3} parent=0 // loop_exit
    _

</llo_original>
